<compile_context>
chip_gen: v7x
topology: tpu7x:2x2x1
jax: 0.10.0
libtpu: 0.0.40
codegen_flags: <defaults>
</compile_context>

<pallas_src>
import functools

import jax
import jax.numpy as jnp
from jax.experimental import pallas as pl
from jax.experimental.pallas import tpu as pltpu


# ---------------------------------------------------------------------------
# In-kernel helpers (f32 math on the VPU/EUP path)
# ---------------------------------------------------------------------------
def _layer_norm(x, g, b, inv_n, mask, eps=1e-5):
    """LayerNorm over the last (padded) dim.  inv_n = 1/C_valid; padded input channels are
    exactly zero, so the unmasked sum gives the correct mean; the centered values are masked
    so the variance only sees real channels; gamma/beta pads are zero so padded outputs
    stay exactly zero."""
    mu = jnp.sum(x, axis=-1, keepdims=True) * inv_n
    d = x - mu
    if mask is not None:
        d = d * mask
    var = jnp.sum(d * d, axis=-1, keepdims=True) * inv_n
    return d * jax.lax.rsqrt(var + eps) * g + b


def _softmax(x, approx):
    m = jnp.max(x, axis=-1, keepdims=True)
    e = jnp.exp(x - m)
    s = jnp.sum(e, axis=-1, keepdims=True)
    if approx:
        return e * pl.reciprocal(s, approx=True)   # EUP slot, not a VALU divide
    return e / s                                   # exact divide on the f32 validation path


# ---------------------------------------------------------------------------
# Kernel: one grid step == one block of `bb` batch elements; everything in VMEM.
# ---------------------------------------------------------------------------
def _cross_attn_block_kernel(
    q_ref, t_ref,
    g1_ref, b1_ref,
    w_qkv_ref, w_p1_ref, b_p1_ref,
    g2q_ref, b2q_ref, g2kv_ref, b2kv_ref,
    w_q2_ref, w_p2_ref, b_p2_ref,
    out_ref,
    *, num_heads, c_valid, approx_recip,
):
    f32 = jnp.float32
    cdt = w_qkv_ref.dtype                      # matmul operand dtype (bf16 by default)

    x = q_ref[...].astype(f32)                 # (bb, Nq, Cp)
    t = t_ref[...].astype(f32)                 # (bb, Nt, Cp)
    bb, Nq, Cp = x.shape
    H, C = num_heads, c_valid
    Dh = C // H
    M = bb * Nq
    scale = Dh ** -0.5                         # head_dim**-0.5 (module uses it for both attns)
    inv_c = 1.0 / C

    mask = None
    if C != Cp:                                # lane mask selecting the real channels
        mask = (jax.lax.broadcasted_iota(jnp.int32, (1, Cp), 1) < C).astype(f32)

    # ===== self-attention branch: x + proj(MHA(LayerNorm(x))) =====
    x2 = x.reshape(M, Cp)                                            # leading-dim merge only
    h1 = _layer_norm(x2, g1_ref[...], b1_ref[...], inv_c, mask)

    # Fused QKV projection: one (M, Cp) @ (Cp, 3*Cp) MXU contraction (no per-head matmuls,
    # no H-fold broadcast of the LHS).
    qkv = jnp.dot(h1.astype(cdt), w_qkv_ref[...], preferred_element_type=f32)   # (M, 3*Cp)
    q3 = (qkv[:, :Cp] * scale).reshape(bb, Nq, Cp).astype(cdt)       # scale folded into q
    k3 = qkv[:, Cp:2 * Cp].reshape(bb, Nq, Cp).astype(cdt)
    v3 = qkv[:, 2 * Cp:].reshape(bb, Nq, Cp).astype(cdt)

    # Per-head attention.  Heads occupy the first C lanes in (head, head_dim) order (same
    # channel layout as the PyTorch module), so head recovery is a static last-dim slice;
    # the score / PV matmuls are inherently Dh-wide contractions.
    o_heads = []
    for h in range(H):
        sl = slice(h * Dh, (h + 1) * Dh)
        s = jnp.einsum("bqd,bkd->bqk", q3[..., sl], k3[..., sl],
                       preferred_element_type=f32)                   # (bb, Nq, Nq)
        p = _softmax(s, approx_recip).astype(cdt)
        o_heads.append(jnp.einsum("bqk,bkd->bqd", p, v3[..., sl],
                                  preferred_element_type=f32))       # (bb, Nq, Dh)
    o = jnp.concatenate(o_heads, axis=-1)                            # (bb, Nq, C), head-major

    # Fused output projection: (M, C) @ (C, Cp) against w_proj1 in its natural layout.
    sa = jnp.dot(o.reshape(M, C).astype(cdt), w_p1_ref[...],
                 preferred_element_type=f32) + b_p1_ref[...]
    x1 = x2 + sa                                                     # (M, Cp); pads stay 0

    # ===== cross-attention: x1 + proj(softmax(q(LN(x1)) @ LN(text)^T) @ LN(text)) =====
    hq = _layer_norm(x1, g2q_ref[...], b2q_ref[...], inv_c, mask).astype(cdt)    # (M, Cp)
    hkv = _layer_norm(t, g2kv_ref[...], b2kv_ref[...], inv_c, mask).astype(cdt)  # (bb, Nt, Cp)

    qq = jnp.dot(hq, w_q2_ref[...], preferred_element_type=f32) * scale          # (M, Cp)
    qq3 = qq.reshape(bb, Nq, Cp).astype(cdt)

    s2 = jnp.einsum("bqc,bkc->bqk", qq3, hkv, preferred_element_type=f32)        # (bb, Nq, Nt)
    p2 = _softmax(s2, approx_recip).astype(cdt)
    ca3 = jnp.einsum("bqk,bkc->bqc", p2, hkv, preferred_element_type=f32)        # (bb, Nq, Cp)
    ca = jnp.dot(ca3.reshape(M, Cp).astype(cdt), w_p2_ref[...],
                 preferred_element_type=f32) + b_p2_ref[...]

    out_ref[...] = (x1 + ca).reshape(bb, Nq, Cp).astype(out_ref.dtype)


# ---------------------------------------------------------------------------
# Wrapper
# ---------------------------------------------------------------------------
def cross_attn_block(query, text, params, num_heads, *,
                     compute_dtype=jnp.bfloat16, block_b=None):
    B, Nq, C = query.shape
    Bt, Nt, Ct = text.shape
    assert Bt == B and Ct == C
    H = num_heads
    assert C % H == 0

    f32 = jnp.float32
    cdt = jnp.dtype(compute_dtype)
    Cp = ((C + 127) // 128) * 128              # lane-dense padded channel count

    # Batch-block size: >=512 rows per step (v6e/v7x MXU streaming dim, amortizes per-step
    # overhead on v5e) while keeping the grid length >= 2 so "parallel" can shard across
    # v7x's two TensorCores.  At B=2 this gives bb=1, grid=(2,).
    if block_b is None:
        target_rows = 512
        divs = [d for d in range(1, B + 1) if B % d == 0]
        cands = [d for d in divs if B // d >= 2] or divs
        fit = [d for d in cands if d * Nq <= target_rows]
        block_b = max(fit) if fit else min(cands)
    bb = block_b
    assert B % bb == 0, "block_b must divide the batch size"

    # --- host-side channel padding / weight layout (weights live in HBM as bf16) ---
    def pad_last(a, n):
        return jnp.pad(a, [(0, 0)] * (a.ndim - 1) + [(0, n - a.shape[-1])])

    def pad2(w, rows, cols):
        return jnp.pad(w, ((0, rows - w.shape[0]), (0, cols - w.shape[1])))

    row = lambda a: pad_last(a.reshape(1, C).astype(f32), Cp)        # (1, Cp) f32

    w_qkv = params["w_qkv"].astype(f32)                              # (C, 3C), y = x @ W
    w_qkv_p = jnp.concatenate(
        [pad2(w_qkv[:, i * C:(i + 1) * C], Cp, Cp) for i in range(3)],
        axis=1).astype(cdt)                                          # (Cp, 3*Cp)
    w_p1_p = pad2(params["w_proj1"].astype(f32), C, Cp).astype(cdt)  # (C, Cp)
    w_q2_p = pad2(params["w_q"].astype(f32), Cp, Cp).astype(cdt)     # (Cp, Cp)
    w_p2_p = pad2(params["w_proj2"].astype(f32), Cp, Cp).astype(cdt) # (Cp, Cp)

    # Sequence tensors: bf16 DMA (halves HBM->VMEM bytes); kernel upcasts to f32 for LN.
    q_in = pad_last(query, Cp).astype(cdt)
    t_in = pad_last(text, Cp).astype(cdt)

    args = [
        q_in, t_in,
        row(params["g1"]), row(params["b1"]),
        w_qkv_p, w_p1_p, row(params["b_proj1"]),
        row(params["g2q"]), row(params["b2q"]), row(params["g2kv"]), row(params["b2kv"]),
        w_q2_p, w_p2_p, row(params["b_proj2"]),
    ]

    seq_spec = lambda N: pl.BlockSpec((bb, N, Cp), lambda i: (i, 0, 0))
    # Grid-invariant weights: constant index_map keeps them resident; Buffered(1) holds them
    # in a single VMEM buffer instead of double-buffering (halves weight VMEM at large C).
    const = lambda shape: pl.BlockSpec(shape, (lambda i, _n=len(shape): (0,) * _n),
                                       pipeline_mode=pl.Buffered(1))

    in_specs = [
        seq_spec(Nq), seq_spec(Nt),
        const((1, Cp)), const((1, Cp)),
        const((Cp, 3 * Cp)), const((C, Cp)), const((1, Cp)),
        const((1, Cp)), const((1, Cp)), const((1, Cp)), const((1, Cp)),
        const((Cp, Cp)), const((Cp, Cp)), const((1, Cp)),
    ]

    # VMEM budget derived from the per-step working set, clamped to v7x's 64 MiB/TC.
    item = cdt.itemsize
    out_item = jnp.dtype(query.dtype).itemsize
    seq_block = bb * Cp * (Nq * item + Nt * item + Nq * out_item)    # one set of seq blocks
    weight_bytes = (3 * Cp * Cp + C * Cp + 2 * Cp * Cp) * item + 8 * Cp * 4
    interm = (13 * bb * Nq * Cp + 2 * bb * Nt * Cp
              + bb * Nq * max(Nq, Nt) * (H + 3)) * 4                 # live f32 intermediates
    est = 2 * seq_block + weight_bytes + interm                      # 2x: double-buffered seq
    vmem_limit = int(min(64 * 2 ** 20, max(32 * 2 ** 20, 2 * est)))

    kernel = functools.partial(
        _cross_attn_block_kernel,
        num_heads=H, c_valid=C,
        approx_recip=(cdt != jnp.dtype(jnp.float32)),
    )

    out_p = pl.pallas_call(
        kernel,
        out_shape=jax.ShapeDtypeStruct((B, Nq, Cp), query.dtype),
        grid_spec=pltpu.PrefetchScalarGridSpec(
            num_scalar_prefetch=0,
            grid=(B // bb,),
            in_specs=in_specs,
            out_specs=seq_spec(Nq),
        ),
        compiler_params=pltpu.CompilerParams(
            dimension_semantics=("parallel",),
            vmem_limit_bytes=vmem_limit,
        ),
    )(*args)

    return out_p[..., :C]          # strip channel padding (cheap XLA slice on the host side)


# ---------------------------------------------------------------------------
# Deterministic parameter init (synthetic; mirrors shapes from __init__)
# ---------------------------------------------------------------------------
def init_params(key, C):
    ks = jax.random.split(key, 12)
    s = C ** -0.5
    f32 = jnp.float32
    return dict(
        g1=1.0 + 0.1 * jax.random.normal(ks[0], (C,), f32),
        b1=0.1 * jax.random.normal(ks[1], (C,), f32),
        w_qkv=s * jax.random.normal(ks[2], (C, 3 * C), f32),      # qkv_bias=False
        w_proj1=s * jax.random.normal(ks[3], (C, C), f32),
        b_proj1=0.1 * jax.random.normal(ks[4], (C,), f32),
        g2q=1.0 + 0.1 * jax.random.normal(ks[5], (C,), f32),
        b2q=0.1 * jax.random.normal(ks[6], (C,), f32),
        g2kv=1.0 + 0.1 * jax.random.normal(ks[7], (C,), f32),
        b2kv=0.1 * jax.random.normal(ks[8], (C,), f32),
        w_q=s * jax.random.normal(ks[9], (C, C), f32),            # bias=False
        w_proj2=s * jax.random.normal(ks[10], (C, C), f32),
        b_proj2=0.1 * jax.random.normal(ks[11], (C,), f32),
    )


# ---------------------------------------------------------------------------
# Pure-JAX reference.  compute_dtype controls the matmul operand precision so it can emulate
# both the exact f32 module and the kernel's bf16 mixed-precision MXU policy.
# ---------------------------------------------------------------------------
def reference(query, text, p, num_heads, compute_dtype=jnp.float32):
    cdt = compute_dtype
    f32 = jnp.float32

    def ln(x, g, b, eps=1e-5):
        mu = jnp.mean(x, -1, keepdims=True)
        var = jnp.mean((x - mu) ** 2, -1, keepdims=True)
        return (x - mu) / jnp.sqrt(var + eps) * g + b

    def mm(a, w):
        return jnp.dot(a.astype(cdt), w.astype(cdt), preferred_element_type=f32)

    B, Nq, C = query.shape
    H = num_heads
    Dh = C // H
    scale = Dh ** -0.5

    h = ln(query, p["g1"], p["b1"])
    qkv = mm(h, p["w_qkv"])
    q, k, v = qkv[..., :C], qkv[..., C:2 * C], qkv[..., 2 * C:]

    split = lambda z: z.reshape(B, -1, H, Dh).transpose(0, 2, 1, 3)
    qh = split(q * scale).astype(cdt)
    kh = split(k).astype(cdt)
    vh = split(v).astype(cdt)
    attn = jnp.einsum("bhqd,bhkd->bhqk", qh, kh, preferred_element_type=f32)
    attn = jax.nn.softmax(attn, -1)
    o = jnp.einsum("bhqk,bhkd->bhqd", attn.astype(cdt), vh, preferred_element_type=f32)
    o = o.transpose(0, 2, 1, 3).reshape(B, Nq, C)
    x1 = query + mm(o, p["w_proj1"]) + p["b_proj1"]

    hq = ln(x1, p["g2q"], p["b2q"])
    hkv = ln(text, p["g2kv"], p["b2kv"])
    qq = mm(hq, p["w_q"]) * scale
    a2 = jnp.einsum("bnc,bmc->bnm", qq.astype(cdt), hkv.astype(cdt),
                    preferred_element_type=f32)
    a2 = jax.nn.softmax(a2, -1)
    ca = jnp.einsum("bnm,bmc->bnc", a2.astype(cdt), hkv.astype(cdt),
                    preferred_element_type=f32)
    ca = mm(ca, p["w_proj2"]) + p["b_proj2"]
    return x1 + ca


# ---------------------------------------------------------------------------
if __name__ == "__main__":
    key = jax.random.PRNGKey(0)
    B, Nq, Nt, C, H = 2, 8, 8, 32, 4   # dim=32, num_heads=4 -> head_dim=8

    k_q, k_t, k_p = jax.random.split(key, 3)
    query = jax.random.normal(k_q, (B, Nq, C), jnp.float32)
    text_features = jax.random.normal(k_t, (B, Nt, C), jnp.float32)
    params = init_params(k_p, C)

    # Perf path: bf16 sequence DMA + bf16 MXU operands, f32 accumulation / LayerNorm / softmax.
    out = jax.block_until_ready(cross_attn_block(query, text_features, params, H))
    assert out.shape == (B, Nq, C)
    # The reference sees the same bf16-rounded sequence inputs the kernel DMAs in.
    q_b = query.astype(jnp.bfloat16).astype(jnp.float32)
    t_b = text_features.astype(jnp.bfloat16).astype(jnp.float32)
    ref_bf16 = reference(q_b, t_b, params, H, compute_dtype=jnp.bfloat16)
    assert jnp.allclose(out, ref_bf16, rtol=2e-2, atol=2e-2), \
        "Pallas kernel mismatch vs bf16 mixed-precision reference"

    # Full-precision path: f32 operands + exact softmax reciprocal -> exact module semantics.
    out_f32 = jax.block_until_ready(
        cross_attn_block(query, text_features, params, H, compute_dtype=jnp.float32))
    ref_f32 = reference(query, text_features, params, H, compute_dtype=jnp.float32)
    assert jnp.allclose(out_f32, ref_f32, rtol=1e-2, atol=1e-2), \
        "Pallas kernel mismatch vs f32 reference"

    print("KERNEL_OK")
</pallas_src>

<mosaic_0001>
module attributes {stable_mosaic.version = 11 : i64} {
  func.func @_cross_attn_block_kernel(%arg0: i32, %arg1: memref<1x8x128xbf16, #tpu.memory_space<vmem>>, %arg2: memref<1x8x128xbf16, #tpu.memory_space<vmem>>, %arg3: memref<1x128xf32, #tpu.memory_space<vmem>>, %arg4: memref<1x128xf32, #tpu.memory_space<vmem>>, %arg5: memref<128x384xbf16, #tpu.memory_space<vmem>>, %arg6: memref<32x128xbf16, #tpu.memory_space<vmem>>, %arg7: memref<1x128xf32, #tpu.memory_space<vmem>>, %arg8: memref<1x128xf32, #tpu.memory_space<vmem>>, %arg9: memref<1x128xf32, #tpu.memory_space<vmem>>, %arg10: memref<1x128xf32, #tpu.memory_space<vmem>>, %arg11: memref<1x128xf32, #tpu.memory_space<vmem>>, %arg12: memref<128x128xbf16, #tpu.memory_space<vmem>>, %arg13: memref<128x128xbf16, #tpu.memory_space<vmem>>, %arg14: memref<1x128xf32, #tpu.memory_space<vmem>>, %arg15: memref<1x8x128xf32, #tpu.memory_space<vmem>>) attributes {dimension_semantics = [#tpu.dimension_semantics<parallel>], iteration_bounds = array<i64: 2>, scalar_prefetch = 0 : i64, scratch_operands = 0 : i64, tpu.core_type = #tpu.core_type<tc>, window_params = [{transform_indices = @transform_0, window_bounds = array<i64: 1, 8, 128>}, {transform_indices = @transform_1, window_bounds = array<i64: 1, 8, 128>}, {pipeline_mode = #tpu.pipeline_mode<synchronous>, transform_indices = @transform_2, window_bounds = array<i64: 1, 128>}, {pipeline_mode = #tpu.pipeline_mode<synchronous>, transform_indices = @transform_3, window_bounds = array<i64: 1, 128>}, {pipeline_mode = #tpu.pipeline_mode<synchronous>, transform_indices = @transform_4, window_bounds = array<i64: 128, 384>}, {pipeline_mode = #tpu.pipeline_mode<synchronous>, transform_indices = @transform_5, window_bounds = array<i64: 32, 128>}, {pipeline_mode = #tpu.pipeline_mode<synchronous>, transform_indices = @transform_6, window_bounds = array<i64: 1, 128>}, {pipeline_mode = #tpu.pipeline_mode<synchronous>, transform_indices = @transform_7, window_bounds = array<i64: 1, 128>}, {pipeline_mode = #tpu.pipeline_mode<synchronous>, transform_indices = @transform_8, window_bounds = array<i64: 1, 128>}, {pipeline_mode = #tpu.pipeline_mode<synchronous>, transform_indices = @transform_9, window_bounds = array<i64: 1, 128>}, {pipeline_mode = #tpu.pipeline_mode<synchronous>, transform_indices = @transform_10, window_bounds = array<i64: 1, 128>}, {pipeline_mode = #tpu.pipeline_mode<synchronous>, transform_indices = @transform_11, window_bounds = array<i64: 128, 128>}, {pipeline_mode = #tpu.pipeline_mode<synchronous>, transform_indices = @transform_12, window_bounds = array<i64: 128, 128>}, {pipeline_mode = #tpu.pipeline_mode<synchronous>, transform_indices = @transform_13, window_bounds = array<i64: 1, 128>}, {transform_indices = @transform_14, window_bounds = array<i64: 1, 8, 128>}]} {
    %c0 = arith.constant 0 : index
    %c0_0 = arith.constant 0 : index
    %c0_1 = arith.constant 0 : index
    %0 = vector.load %arg1[%c0, %c0_0, %c0_1] : memref<1x8x128xbf16, #tpu.memory_space<vmem>>, vector<1x8x128xbf16>
    %1 = arith.extf %0 : vector<1x8x128xbf16> to vector<1x8x128xf32>
    %c0_2 = arith.constant 0 : index
    %c0_3 = arith.constant 0 : index
    %c0_4 = arith.constant 0 : index
    %2 = vector.load %arg2[%c0_2, %c0_3, %c0_4] : memref<1x8x128xbf16, #tpu.memory_space<vmem>>, vector<1x8x128xbf16>
    %3 = arith.extf %2 : vector<1x8x128xbf16> to vector<1x8x128xf32>
    %4 = tpu.iota {dimensions = array<i32: 1>} : vector<1x128xi32>
    %c32_i32 = arith.constant 32 : i32
    %5 = vector.broadcast %c32_i32 : i32 to vector<1x128xi32>
    %6 = arith.cmpi slt, %4, %5 : vector<1x128xi32>
    %7 = arith.extui %6 : vector<1x128xi1> to vector<1x128xi32>
    %8 = arith.sitofp %7 : vector<1x128xi32> to vector<1x128xf32>
    %9 = vector.shape_cast %1 : vector<1x8x128xf32> to vector<8x128xf32>
    %c0_5 = arith.constant 0 : index
    %c0_6 = arith.constant 0 : index
    %10 = vector.load %arg3[%c0_5, %c0_6] : memref<1x128xf32, #tpu.memory_space<vmem>>, vector<1x128xf32>
    %c0_7 = arith.constant 0 : index
    %c0_8 = arith.constant 0 : index
    %11 = vector.load %arg4[%c0_7, %c0_8] : memref<1x128xf32, #tpu.memory_space<vmem>>, vector<1x128xf32>
    %cst = arith.constant dense<0.000000e+00> : vector<8xf32>
    %12 = vector.multi_reduction <add>, %9, %cst [1] : vector<8x128xf32> to vector<8xf32>
    %13 = vector.shape_cast %12 : vector<8xf32> to vector<8x1xf32>
    %cst_9 = arith.constant 3.125000e-02 : f32
    %14 = vector.broadcast %cst_9 : f32 to vector<8x1xf32>
    %15 = arith.mulf %13, %14 : vector<8x1xf32>
    %16 = vector.broadcast %15 : vector<8x1xf32> to vector<8x128xf32>
    %17 = arith.subf %9, %16 : vector<8x128xf32>
    %18 = vector.broadcast %8 : vector<1x128xf32> to vector<8x128xf32>
    %19 = arith.mulf %17, %18 : vector<8x128xf32>
    %20 = arith.mulf %19, %19 : vector<8x128xf32>
    %cst_10 = arith.constant dense<0.000000e+00> : vector<8xf32>
    %21 = vector.multi_reduction <add>, %20, %cst_10 [1] : vector<8x128xf32> to vector<8xf32>
    %22 = vector.shape_cast %21 : vector<8xf32> to vector<8x1xf32>
    %cst_11 = arith.constant 3.125000e-02 : f32
    %23 = vector.broadcast %cst_11 : f32 to vector<8x1xf32>
    %24 = arith.mulf %22, %23 : vector<8x1xf32>
    %cst_12 = arith.constant 9.99999974E-6 : f32
    %25 = vector.broadcast %cst_12 : f32 to vector<8x1xf32>
    %26 = arith.addf %24, %25 : vector<8x1xf32>
    %27 = math.rsqrt %26 : vector<8x1xf32>
    %28 = vector.broadcast %27 : vector<8x1xf32> to vector<8x128xf32>
    %29 = arith.mulf %19, %28 : vector<8x128xf32>
    %30 = vector.broadcast %10 : vector<1x128xf32> to vector<8x128xf32>
    %31 = arith.mulf %29, %30 : vector<8x128xf32>
    %32 = vector.broadcast %11 : vector<1x128xf32> to vector<8x128xf32>
    %33 = arith.addf %31, %32 : vector<8x128xf32>
    %34 = arith.truncf %33 : vector<8x128xf32> to vector<8x128xbf16>
    %c0_13 = arith.constant 0 : index
    %c0_14 = arith.constant 0 : index
    %35 = vector.load %arg5[%c0_13, %c0_14] : memref<128x384xbf16, #tpu.memory_space<vmem>>, vector<128x384xbf16>
    %cst_15 = arith.constant dense<0.000000e+00> : vector<8x384xf32>
    %36 = tpu.matmul %34, %35, %cst_15 {dimension_numbers = #tpu.dot_dimension_numbers<[1], [0], [0], [1], [0, 0, 1, 1], [], []>} : vector<8x128xbf16>, vector<128x384xbf16>, vector<8x384xf32> -> vector<8x384xf32>
    %37 = vector.extract_strided_slice %36 {offsets = [0, 0], sizes = [8, 128], strides = [1, 1]} : vector<8x384xf32> to vector<8x128xf32>
    %cst_16 = arith.constant 0.353553385 : f32
    %38 = vector.broadcast %cst_16 : f32 to vector<8x128xf32>
    %39 = arith.mulf %37, %38 : vector<8x128xf32>
    %40 = vector.shape_cast %39 : vector<8x128xf32> to vector<1x8x128xf32>
    %41 = arith.truncf %40 : vector<1x8x128xf32> to vector<1x8x128xbf16>
    %42 = vector.extract_strided_slice %36 {offsets = [0, 128], sizes = [8, 128], strides = [1, 1]} : vector<8x384xf32> to vector<8x128xf32>
    %43 = vector.shape_cast %42 : vector<8x128xf32> to vector<1x8x128xf32>
    %44 = arith.truncf %43 : vector<1x8x128xf32> to vector<1x8x128xbf16>
    %45 = vector.extract_strided_slice %36 {offsets = [0, 256], sizes = [8, 128], strides = [1, 1]} : vector<8x384xf32> to vector<8x128xf32>
    %46 = vector.shape_cast %45 : vector<8x128xf32> to vector<1x8x128xf32>
    %47 = arith.truncf %46 : vector<1x8x128xf32> to vector<1x8x128xbf16>
    %48 = vector.extract_strided_slice %41 {offsets = [0, 0, 0], sizes = [1, 8, 8], strides = [1, 1, 1]} : vector<1x8x128xbf16> to vector<1x8x8xbf16>
    %49 = vector.extract_strided_slice %44 {offsets = [0, 0, 0], sizes = [1, 8, 8], strides = [1, 1, 1]} : vector<1x8x128xbf16> to vector<1x8x8xbf16>
    "tpu.trace_start"() <{level = 10 : i32, message = "bqd,bkd->bqk"}> : () -> ()
    %cst_17 = arith.constant dense<0.000000e+00> : vector<1x8x8xf32>
    %50 = tpu.matmul %48, %49, %cst_17 {dimension_numbers = #tpu.dot_dimension_numbers<[2], [2], [1], [1], [0, 0, 0, 1, 1, 1], [0], [0]>} : vector<1x8x8xbf16>, vector<1x8x8xbf16>, vector<1x8x8xf32> -> vector<1x8x8xf32>
    "tpu.trace_stop"() : () -> ()
    %cst_18 = arith.constant dense<0xFF800000> : vector<1x8xf32>
    %51 = vector.multi_reduction <maximumf>, %50, %cst_18 [2] : vector<1x8x8xf32> to vector<1x8xf32>
    %52 = vector.shape_cast %51 : vector<1x8xf32> to vector<1x8x1xf32>
    %53 = vector.broadcast %52 : vector<1x8x1xf32> to vector<1x8x8xf32>
    %54 = arith.subf %50, %53 : vector<1x8x8xf32>
    %55 = math.exp %54 : vector<1x8x8xf32>
    %cst_19 = arith.constant dense<0.000000e+00> : vector<1x8xf32>
    %56 = vector.multi_reduction <add>, %55, %cst_19 [2] : vector<1x8x8xf32> to vector<1x8xf32>
    %57 = vector.shape_cast %56 : vector<1x8xf32> to vector<1x8x1xf32>
    %58 = tpu.reciprocal %57 {approx = true} : vector<1x8x1xf32> -> vector<1x8x1xf32>
    %59 = vector.broadcast %58 : vector<1x8x1xf32> to vector<1x8x8xf32>
    %60 = arith.mulf %55, %59 : vector<1x8x8xf32>
    %61 = arith.truncf %60 : vector<1x8x8xf32> to vector<1x8x8xbf16>
    %62 = vector.extract_strided_slice %47 {offsets = [0, 0, 0], sizes = [1, 8, 8], strides = [1, 1, 1]} : vector<1x8x128xbf16> to vector<1x8x8xbf16>
    "tpu.trace_start"() <{level = 10 : i32, message = "bqk,bkd->bqd"}> : () -> ()
    %cst_20 = arith.constant dense<0.000000e+00> : vector<1x8x8xf32>
    %63 = tpu.matmul %61, %62, %cst_20 {dimension_numbers = #tpu.dot_dimension_numbers<[2], [1], [1], [2], [0, 0, 0, 1, 1, 2], [0], [0]>} : vector<1x8x8xbf16>, vector<1x8x8xbf16>, vector<1x8x8xf32> -> vector<1x8x8xf32>
    "tpu.trace_stop"() : () -> ()
    %64 = vector.extract_strided_slice %41 {offsets = [0, 0, 8], sizes = [1, 8, 8], strides = [1, 1, 1]} : vector<1x8x128xbf16> to vector<1x8x8xbf16>
    %65 = vector.extract_strided_slice %44 {offsets = [0, 0, 8], sizes = [1, 8, 8], strides = [1, 1, 1]} : vector<1x8x128xbf16> to vector<1x8x8xbf16>
    "tpu.trace_start"() <{level = 10 : i32, message = "bqd,bkd->bqk"}> : () -> ()
    %cst_21 = arith.constant dense<0.000000e+00> : vector<1x8x8xf32>
    %66 = tpu.matmul %64, %65, %cst_21 {dimension_numbers = #tpu.dot_dimension_numbers<[2], [2], [1], [1], [0, 0, 0, 1, 1, 1], [0], [0]>} : vector<1x8x8xbf16>, vector<1x8x8xbf16>, vector<1x8x8xf32> -> vector<1x8x8xf32>
    "tpu.trace_stop"() : () -> ()
    %cst_22 = arith.constant dense<0xFF800000> : vector<1x8xf32>
    %67 = vector.multi_reduction <maximumf>, %66, %cst_22 [2] : vector<1x8x8xf32> to vector<1x8xf32>
    %68 = vector.shape_cast %67 : vector<1x8xf32> to vector<1x8x1xf32>
    %69 = vector.broadcast %68 : vector<1x8x1xf32> to vector<1x8x8xf32>
    %70 = arith.subf %66, %69 : vector<1x8x8xf32>
    %71 = math.exp %70 : vector<1x8x8xf32>
    %cst_23 = arith.constant dense<0.000000e+00> : vector<1x8xf32>
    %72 = vector.multi_reduction <add>, %71, %cst_23 [2] : vector<1x8x8xf32> to vector<1x8xf32>
    %73 = vector.shape_cast %72 : vector<1x8xf32> to vector<1x8x1xf32>
    %74 = tpu.reciprocal %73 {approx = true} : vector<1x8x1xf32> -> vector<1x8x1xf32>
    %75 = vector.broadcast %74 : vector<1x8x1xf32> to vector<1x8x8xf32>
    %76 = arith.mulf %71, %75 : vector<1x8x8xf32>
    %77 = arith.truncf %76 : vector<1x8x8xf32> to vector<1x8x8xbf16>
    %78 = vector.extract_strided_slice %47 {offsets = [0, 0, 8], sizes = [1, 8, 8], strides = [1, 1, 1]} : vector<1x8x128xbf16> to vector<1x8x8xbf16>
    "tpu.trace_start"() <{level = 10 : i32, message = "bqk,bkd->bqd"}> : () -> ()
    %cst_24 = arith.constant dense<0.000000e+00> : vector<1x8x8xf32>
    %79 = tpu.matmul %77, %78, %cst_24 {dimension_numbers = #tpu.dot_dimension_numbers<[2], [1], [1], [2], [0, 0, 0, 1, 1, 2], [0], [0]>} : vector<1x8x8xbf16>, vector<1x8x8xbf16>, vector<1x8x8xf32> -> vector<1x8x8xf32>
    "tpu.trace_stop"() : () -> ()
    %80 = vector.extract_strided_slice %41 {offsets = [0, 0, 16], sizes = [1, 8, 8], strides = [1, 1, 1]} : vector<1x8x128xbf16> to vector<1x8x8xbf16>
    %81 = vector.extract_strided_slice %44 {offsets = [0, 0, 16], sizes = [1, 8, 8], strides = [1, 1, 1]} : vector<1x8x128xbf16> to vector<1x8x8xbf16>
    "tpu.trace_start"() <{level = 10 : i32, message = "bqd,bkd->bqk"}> : () -> ()
    %cst_25 = arith.constant dense<0.000000e+00> : vector<1x8x8xf32>
    %82 = tpu.matmul %80, %81, %cst_25 {dimension_numbers = #tpu.dot_dimension_numbers<[2], [2], [1], [1], [0, 0, 0, 1, 1, 1], [0], [0]>} : vector<1x8x8xbf16>, vector<1x8x8xbf16>, vector<1x8x8xf32> -> vector<1x8x8xf32>
    "tpu.trace_stop"() : () -> ()
    %cst_26 = arith.constant dense<0xFF800000> : vector<1x8xf32>
    %83 = vector.multi_reduction <maximumf>, %82, %cst_26 [2] : vector<1x8x8xf32> to vector<1x8xf32>
    %84 = vector.shape_cast %83 : vector<1x8xf32> to vector<1x8x1xf32>
    %85 = vector.broadcast %84 : vector<1x8x1xf32> to vector<1x8x8xf32>
    %86 = arith.subf %82, %85 : vector<1x8x8xf32>
    %87 = math.exp %86 : vector<1x8x8xf32>
    %cst_27 = arith.constant dense<0.000000e+00> : vector<1x8xf32>
    %88 = vector.multi_reduction <add>, %87, %cst_27 [2] : vector<1x8x8xf32> to vector<1x8xf32>
    %89 = vector.shape_cast %88 : vector<1x8xf32> to vector<1x8x1xf32>
    %90 = tpu.reciprocal %89 {approx = true} : vector<1x8x1xf32> -> vector<1x8x1xf32>
    %91 = vector.broadcast %90 : vector<1x8x1xf32> to vector<1x8x8xf32>
    %92 = arith.mulf %87, %91 : vector<1x8x8xf32>
    %93 = arith.truncf %92 : vector<1x8x8xf32> to vector<1x8x8xbf16>
    %94 = vector.extract_strided_slice %47 {offsets = [0, 0, 16], sizes = [1, 8, 8], strides = [1, 1, 1]} : vector<1x8x128xbf16> to vector<1x8x8xbf16>
    "tpu.trace_start"() <{level = 10 : i32, message = "bqk,bkd->bqd"}> : () -> ()
    %cst_28 = arith.constant dense<0.000000e+00> : vector<1x8x8xf32>
    %95 = tpu.matmul %93, %94, %cst_28 {dimension_numbers = #tpu.dot_dimension_numbers<[2], [1], [1], [2], [0, 0, 0, 1, 1, 2], [0], [0]>} : vector<1x8x8xbf16>, vector<1x8x8xbf16>, vector<1x8x8xf32> -> vector<1x8x8xf32>
    "tpu.trace_stop"() : () -> ()
    %96 = vector.extract_strided_slice %41 {offsets = [0, 0, 24], sizes = [1, 8, 8], strides = [1, 1, 1]} : vector<1x8x128xbf16> to vector<1x8x8xbf16>
    %97 = vector.extract_strided_slice %44 {offsets = [0, 0, 24], sizes = [1, 8, 8], strides = [1, 1, 1]} : vector<1x8x128xbf16> to vector<1x8x8xbf16>
    "tpu.trace_start"() <{level = 10 : i32, message = "bqd,bkd->bqk"}> : () -> ()
    %cst_29 = arith.constant dense<0.000000e+00> : vector<1x8x8xf32>
    %98 = tpu.matmul %96, %97, %cst_29 {dimension_numbers = #tpu.dot_dimension_numbers<[2], [2], [1], [1], [0, 0, 0, 1, 1, 1], [0], [0]>} : vector<1x8x8xbf16>, vector<1x8x8xbf16>, vector<1x8x8xf32> -> vector<1x8x8xf32>
    "tpu.trace_stop"() : () -> ()
    %cst_30 = arith.constant dense<0xFF800000> : vector<1x8xf32>
    %99 = vector.multi_reduction <maximumf>, %98, %cst_30 [2] : vector<1x8x8xf32> to vector<1x8xf32>
    %100 = vector.shape_cast %99 : vector<1x8xf32> to vector<1x8x1xf32>
    %101 = vector.broadcast %100 : vector<1x8x1xf32> to vector<1x8x8xf32>
    %102 = arith.subf %98, %101 : vector<1x8x8xf32>
    %103 = math.exp %102 : vector<1x8x8xf32>
    %cst_31 = arith.constant dense<0.000000e+00> : vector<1x8xf32>
    %104 = vector.multi_reduction <add>, %103, %cst_31 [2] : vector<1x8x8xf32> to vector<1x8xf32>
    %105 = vector.shape_cast %104 : vector<1x8xf32> to vector<1x8x1xf32>
    %106 = tpu.reciprocal %105 {approx = true} : vector<1x8x1xf32> -> vector<1x8x1xf32>
    %107 = vector.broadcast %106 : vector<1x8x1xf32> to vector<1x8x8xf32>
    %108 = arith.mulf %103, %107 : vector<1x8x8xf32>
    %109 = arith.truncf %108 : vector<1x8x8xf32> to vector<1x8x8xbf16>
    %110 = vector.extract_strided_slice %47 {offsets = [0, 0, 24], sizes = [1, 8, 8], strides = [1, 1, 1]} : vector<1x8x128xbf16> to vector<1x8x8xbf16>
    "tpu.trace_start"() <{level = 10 : i32, message = "bqk,bkd->bqd"}> : () -> ()
    %cst_32 = arith.constant dense<0.000000e+00> : vector<1x8x8xf32>
    %111 = tpu.matmul %109, %110, %cst_32 {dimension_numbers = #tpu.dot_dimension_numbers<[2], [1], [1], [2], [0, 0, 0, 1, 1, 2], [0], [0]>} : vector<1x8x8xbf16>, vector<1x8x8xbf16>, vector<1x8x8xf32> -> vector<1x8x8xf32>
    "tpu.trace_stop"() : () -> ()
    %112 = tpu.concatenate %63, %79, %95, %111 in 2 : vector<1x8x8xf32>, vector<1x8x8xf32>, vector<1x8x8xf32>, vector<1x8x8xf32> -> vector<1x8x32xf32>
    %113 = vector.shape_cast %112 : vector<1x8x32xf32> to vector<8x32xf32>
    %114 = arith.truncf %113 : vector<8x32xf32> to vector<8x32xbf16>
    %c0_33 = arith.constant 0 : index
    %c0_34 = arith.constant 0 : index
    %115 = vector.load %arg6[%c0_33, %c0_34] : memref<32x128xbf16, #tpu.memory_space<vmem>>, vector<32x128xbf16>
    %cst_35 = arith.constant dense<0.000000e+00> : vector<8x128xf32>
    %116 = tpu.matmul %114, %115, %cst_35 {dimension_numbers = #tpu.dot_dimension_numbers<[1], [0], [0], [1], [0, 0, 1, 1], [], []>} : vector<8x32xbf16>, vector<32x128xbf16>, vector<8x128xf32> -> vector<8x128xf32>
    %c0_36 = arith.constant 0 : index
    %c0_37 = arith.constant 0 : index
    %117 = vector.load %arg7[%c0_36, %c0_37] : memref<1x128xf32, #tpu.memory_space<vmem>>, vector<1x128xf32>
    %118 = vector.broadcast %117 : vector<1x128xf32> to vector<8x128xf32>
    %119 = arith.addf %116, %118 : vector<8x128xf32>
    %120 = arith.addf %9, %119 : vector<8x128xf32>
    %c0_38 = arith.constant 0 : index
    %c0_39 = arith.constant 0 : index
    %121 = vector.load %arg8[%c0_38, %c0_39] : memref<1x128xf32, #tpu.memory_space<vmem>>, vector<1x128xf32>
    %c0_40 = arith.constant 0 : index
    %c0_41 = arith.constant 0 : index
    %122 = vector.load %arg9[%c0_40, %c0_41] : memref<1x128xf32, #tpu.memory_space<vmem>>, vector<1x128xf32>
    %cst_42 = arith.constant dense<0.000000e+00> : vector<8xf32>
    %123 = vector.multi_reduction <add>, %120, %cst_42 [1] : vector<8x128xf32> to vector<8xf32>
    %124 = vector.shape_cast %123 : vector<8xf32> to vector<8x1xf32>
    %cst_43 = arith.constant 3.125000e-02 : f32
    %125 = vector.broadcast %cst_43 : f32 to vector<8x1xf32>
    %126 = arith.mulf %124, %125 : vector<8x1xf32>
    %127 = vector.broadcast %126 : vector<8x1xf32> to vector<8x128xf32>
    %128 = arith.subf %120, %127 : vector<8x128xf32>
    %129 = vector.broadcast %8 : vector<1x128xf32> to vector<8x128xf32>
    %130 = arith.mulf %128, %129 : vector<8x128xf32>
    %131 = arith.mulf %130, %130 : vector<8x128xf32>
    %cst_44 = arith.constant dense<0.000000e+00> : vector<8xf32>
    %132 = vector.multi_reduction <add>, %131, %cst_44 [1] : vector<8x128xf32> to vector<8xf32>
    %133 = vector.shape_cast %132 : vector<8xf32> to vector<8x1xf32>
    %cst_45 = arith.constant 3.125000e-02 : f32
    %134 = vector.broadcast %cst_45 : f32 to vector<8x1xf32>
    %135 = arith.mulf %133, %134 : vector<8x1xf32>
    %cst_46 = arith.constant 9.99999974E-6 : f32
    %136 = vector.broadcast %cst_46 : f32 to vector<8x1xf32>
    %137 = arith.addf %135, %136 : vector<8x1xf32>
    %138 = math.rsqrt %137 : vector<8x1xf32>
    %139 = vector.broadcast %138 : vector<8x1xf32> to vector<8x128xf32>
    %140 = arith.mulf %130, %139 : vector<8x128xf32>
    %141 = vector.broadcast %121 : vector<1x128xf32> to vector<8x128xf32>
    %142 = arith.mulf %140, %141 : vector<8x128xf32>
    %143 = vector.broadcast %122 : vector<1x128xf32> to vector<8x128xf32>
    %144 = arith.addf %142, %143 : vector<8x128xf32>
    %145 = arith.truncf %144 : vector<8x128xf32> to vector<8x128xbf16>
    %c0_47 = arith.constant 0 : index
    %c0_48 = arith.constant 0 : index
    %146 = vector.load %arg10[%c0_47, %c0_48] : memref<1x128xf32, #tpu.memory_space<vmem>>, vector<1x128xf32>
    %c0_49 = arith.constant 0 : index
    %c0_50 = arith.constant 0 : index
    %147 = vector.load %arg11[%c0_49, %c0_50] : memref<1x128xf32, #tpu.memory_space<vmem>>, vector<1x128xf32>
    %cst_51 = arith.constant dense<0.000000e+00> : vector<1x8xf32>
    %148 = vector.multi_reduction <add>, %3, %cst_51 [2] : vector<1x8x128xf32> to vector<1x8xf32>
    %149 = vector.shape_cast %148 : vector<1x8xf32> to vector<1x8x1xf32>
    %cst_52 = arith.constant 3.125000e-02 : f32
    %150 = vector.broadcast %cst_52 : f32 to vector<1x8x1xf32>
    %151 = arith.mulf %149, %150 : vector<1x8x1xf32>
    %152 = vector.broadcast %151 : vector<1x8x1xf32> to vector<1x8x128xf32>
    %153 = arith.subf %3, %152 : vector<1x8x128xf32>
    %154 = vector.shape_cast %8 : vector<1x128xf32> to vector<1x1x128xf32>
    %155 = vector.broadcast %154 : vector<1x1x128xf32> to vector<1x8x128xf32>
    %156 = arith.mulf %153, %155 : vector<1x8x128xf32>
    %157 = arith.mulf %156, %156 : vector<1x8x128xf32>
    %cst_53 = arith.constant dense<0.000000e+00> : vector<1x8xf32>
    %158 = vector.multi_reduction <add>, %157, %cst_53 [2] : vector<1x8x128xf32> to vector<1x8xf32>
    %159 = vector.shape_cast %158 : vector<1x8xf32> to vector<1x8x1xf32>
    %cst_54 = arith.constant 3.125000e-02 : f32
    %160 = vector.broadcast %cst_54 : f32 to vector<1x8x1xf32>
    %161 = arith.mulf %159, %160 : vector<1x8x1xf32>
    %cst_55 = arith.constant 9.99999974E-6 : f32
    %162 = vector.broadcast %cst_55 : f32 to vector<1x8x1xf32>
    %163 = arith.addf %161, %162 : vector<1x8x1xf32>
    %164 = math.rsqrt %163 : vector<1x8x1xf32>
    %165 = vector.broadcast %164 : vector<1x8x1xf32> to vector<1x8x128xf32>
    %166 = arith.mulf %156, %165 : vector<1x8x128xf32>
    %167 = vector.shape_cast %146 : vector<1x128xf32> to vector<1x1x128xf32>
    %168 = vector.broadcast %167 : vector<1x1x128xf32> to vector<1x8x128xf32>
    %169 = arith.mulf %166, %168 : vector<1x8x128xf32>
    %170 = vector.shape_cast %147 : vector<1x128xf32> to vector<1x1x128xf32>
    %171 = vector.broadcast %170 : vector<1x1x128xf32> to vector<1x8x128xf32>
    %172 = arith.addf %169, %171 : vector<1x8x128xf32>
    %173 = arith.truncf %172 : vector<1x8x128xf32> to vector<1x8x128xbf16>
    %c0_56 = arith.constant 0 : index
    %c0_57 = arith.constant 0 : index
    %174 = vector.load %arg12[%c0_56, %c0_57] : memref<128x128xbf16, #tpu.memory_space<vmem>>, vector<128x128xbf16>
    %cst_58 = arith.constant dense<0.000000e+00> : vector<8x128xf32>
    %175 = tpu.matmul %145, %174, %cst_58 {dimension_numbers = #tpu.dot_dimension_numbers<[1], [0], [0], [1], [0, 0, 1, 1], [], []>} : vector<8x128xbf16>, vector<128x128xbf16>, vector<8x128xf32> -> vector<8x128xf32>
    %cst_59 = arith.constant 0.353553385 : f32
    %176 = vector.broadcast %cst_59 : f32 to vector<8x128xf32>
    %177 = arith.mulf %175, %176 : vector<8x128xf32>
    %178 = vector.shape_cast %177 : vector<8x128xf32> to vector<1x8x128xf32>
    %179 = arith.truncf %178 : vector<1x8x128xf32> to vector<1x8x128xbf16>
    "tpu.trace_start"() <{level = 10 : i32, message = "bqc,bkc->bqk"}> : () -> ()
    %cst_60 = arith.constant dense<0.000000e+00> : vector<1x8x8xf32>
    %180 = tpu.matmul %179, %173, %cst_60 {dimension_numbers = #tpu.dot_dimension_numbers<[2], [2], [1], [1], [0, 0, 0, 1, 1, 1], [0], [0]>} : vector<1x8x128xbf16>, vector<1x8x128xbf16>, vector<1x8x8xf32> -> vector<1x8x8xf32>
    "tpu.trace_stop"() : () -> ()
    %cst_61 = arith.constant dense<0xFF800000> : vector<1x8xf32>
    %181 = vector.multi_reduction <maximumf>, %180, %cst_61 [2] : vector<1x8x8xf32> to vector<1x8xf32>
    %182 = vector.shape_cast %181 : vector<1x8xf32> to vector<1x8x1xf32>
    %183 = vector.broadcast %182 : vector<1x8x1xf32> to vector<1x8x8xf32>
    %184 = arith.subf %180, %183 : vector<1x8x8xf32>
    %185 = math.exp %184 : vector<1x8x8xf32>
    %cst_62 = arith.constant dense<0.000000e+00> : vector<1x8xf32>
    %186 = vector.multi_reduction <add>, %185, %cst_62 [2] : vector<1x8x8xf32> to vector<1x8xf32>
    %187 = vector.shape_cast %186 : vector<1x8xf32> to vector<1x8x1xf32>
    %188 = tpu.reciprocal %187 {approx = true} : vector<1x8x1xf32> -> vector<1x8x1xf32>
    %189 = vector.broadcast %188 : vector<1x8x1xf32> to vector<1x8x8xf32>
    %190 = arith.mulf %185, %189 : vector<1x8x8xf32>
    %191 = arith.truncf %190 : vector<1x8x8xf32> to vector<1x8x8xbf16>
    "tpu.trace_start"() <{level = 10 : i32, message = "bqk,bkc->bqc"}> : () -> ()
    %cst_63 = arith.constant dense<0.000000e+00> : vector<1x8x128xf32>
    %192 = tpu.matmul %191, %173, %cst_63 {dimension_numbers = #tpu.dot_dimension_numbers<[2], [1], [1], [2], [0, 0, 0, 1, 1, 2], [0], [0]>} : vector<1x8x8xbf16>, vector<1x8x128xbf16>, vector<1x8x128xf32> -> vector<1x8x128xf32>
    "tpu.trace_stop"() : () -> ()
    %193 = vector.shape_cast %192 : vector<1x8x128xf32> to vector<8x128xf32>
    %194 = arith.truncf %193 : vector<8x128xf32> to vector<8x128xbf16>
    %c0_64 = arith.constant 0 : index
    %c0_65 = arith.constant 0 : index
    %195 = vector.load %arg13[%c0_64, %c0_65] : memref<128x128xbf16, #tpu.memory_space<vmem>>, vector<128x128xbf16>
    %cst_66 = arith.constant dense<0.000000e+00> : vector<8x128xf32>
    %196 = tpu.matmul %194, %195, %cst_66 {dimension_numbers = #tpu.dot_dimension_numbers<[1], [0], [0], [1], [0, 0, 1, 1], [], []>} : vector<8x128xbf16>, vector<128x128xbf16>, vector<8x128xf32> -> vector<8x128xf32>
    %c0_67 = arith.constant 0 : index
    %c0_68 = arith.constant 0 : index
    %197 = vector.load %arg14[%c0_67, %c0_68] : memref<1x128xf32, #tpu.memory_space<vmem>>, vector<1x128xf32>
    %198 = vector.broadcast %197 : vector<1x128xf32> to vector<8x128xf32>
    %199 = arith.addf %196, %198 : vector<8x128xf32>
    %200 = arith.addf %120, %199 : vector<8x128xf32>
    %201 = vector.shape_cast %200 : vector<8x128xf32> to vector<1x8x128xf32>
    %c0_69 = arith.constant 0 : index
    %c0_70 = arith.constant 0 : index
    %c0_71 = arith.constant 0 : index
    %202 = vector.load %arg15[%c0_69, %c0_70, %c0_71] : memref<1x8x128xf32, #tpu.memory_space<vmem>>, vector<1x8x128xf32>
    tpu.vector_store %arg15[%c0_69, %c0_70, %c0_71], %201 {strides = array<i32>} : memref<1x8x128xf32, #tpu.memory_space<vmem>>, vector<1x8x128xf32>,
    return
  }
  func.func @transform_0(%arg0: i32) -> (i32, i32, i32) {
    %c0_i32 = arith.constant 0 : i32
    %c0_i32_0 = arith.constant 0 : i32
    %c0_i32_1 = arith.constant 0 : i32
    return %arg0, %c0_i32, %c0_i32_0 : i32, i32, i32
  }
  func.func @transform_1(%arg0: i32) -> (i32, i32, i32) {
    %c0_i32 = arith.constant 0 : i32
    %c0_i32_0 = arith.constant 0 : i32
    %c0_i32_1 = arith.constant 0 : i32
    return %arg0, %c0_i32, %c0_i32_0 : i32, i32, i32
  }
  func.func @transform_2(%arg0: i32) -> (i32, i32) {
    %c0_i32 = arith.constant 0 : i32
    %c0_i32_0 = arith.constant 0 : i32
    %c0_i32_1 = arith.constant 0 : i32
    return %c0_i32, %c0_i32_0 : i32, i32
  }
  func.func @transform_3(%arg0: i32) -> (i32, i32) {
    %c0_i32 = arith.constant 0 : i32
    %c0_i32_0 = arith.constant 0 : i32
    %c0_i32_1 = arith.constant 0 : i32
    return %c0_i32, %c0_i32_0 : i32, i32
  }
  func.func @transform_4(%arg0: i32) -> (i32, i32) {
    %c0_i32 = arith.constant 0 : i32
    %c0_i32_0 = arith.constant 0 : i32
    %c0_i32_1 = arith.constant 0 : i32
    return %c0_i32, %c0_i32_0 : i32, i32
  }
  func.func @transform_5(%arg0: i32) -> (i32, i32) {
    %c0_i32 = arith.constant 0 : i32
    %c0_i32_0 = arith.constant 0 : i32
    %c0_i32_1 = arith.constant 0 : i32
    return %c0_i32, %c0_i32_0 : i32, i32
  }
  func.func @transform_6(%arg0: i32) -> (i32, i32) {
    %c0_i32 = arith.constant 0 : i32
    %c0_i32_0 = arith.constant 0 : i32
    %c0_i32_1 = arith.constant 0 : i32
    return %c0_i32, %c0_i32_0 : i32, i32
  }
  func.func @transform_7(%arg0: i32) -> (i32, i32) {
    %c0_i32 = arith.constant 0 : i32
    %c0_i32_0 = arith.constant 0 : i32
    %c0_i32_1 = arith.constant 0 : i32
    return %c0_i32, %c0_i32_0 : i32, i32
  }
  func.func @transform_8(%arg0: i32) -> (i32, i32) {
    %c0_i32 = arith.constant 0 : i32
    %c0_i32_0 = arith.constant 0 : i32
    %c0_i32_1 = arith.constant 0 : i32
    return %c0_i32, %c0_i32_0 : i32, i32
  }
  func.func @transform_9(%arg0: i32) -> (i32, i32) {
    %c0_i32 = arith.constant 0 : i32
    %c0_i32_0 = arith.constant 0 : i32
    %c0_i32_1 = arith.constant 0 : i32
    return %c0_i32, %c0_i32_0 : i32, i32
  }
  func.func @transform_10(%arg0: i32) -> (i32, i32) {
    %c0_i32 = arith.constant 0 : i32
    %c0_i32_0 = arith.constant 0 : i32
    %c0_i32_1 = arith.constant 0 : i32
    return %c0_i32, %c0_i32_0 : i32, i32
  }
  func.func @transform_11(%arg0: i32) -> (i32, i32) {
    %c0_i32 = arith.constant 0 : i32
    %c0_i32_0 = arith.constant 0 : i32
    %c0_i32_1 = arith.constant 0 : i32
    return %c0_i32, %c0_i32_0 : i32, i32
  }
  func.func @transform_12(%arg0: i32) -> (i32, i32) {
    %c0_i32 = arith.constant 0 : i32
    %c0_i32_0 = arith.constant 0 : i32
    %c0_i32_1 = arith.constant 0 : i32
    return %c0_i32, %c0_i32_0 : i32, i32
  }
  func.func @transform_13(%arg0: i32) -> (i32, i32) {
    %c0_i32 = arith.constant 0 : i32
    %c0_i32_0 = arith.constant 0 : i32
    %c0_i32_1 = arith.constant 0 : i32
    return %c0_i32, %c0_i32_0 : i32, i32
  }
  func.func @transform_14(%arg0: i32) -> (i32, i32, i32) {
    %c0_i32 = arith.constant 0 : i32
    %c0_i32_0 = arith.constant 0 : i32
    %c0_i32_1 = arith.constant 0 : i32
    return %arg0, %c0_i32, %c0_i32_0 : i32, i32, i32
  }
}

</mosaic_0001>

<llo_original>
// kernel: tpu_custom_call.1
$region0: #{tpu_custom_call.1}
  #allocation0 [shape = 'u32[]', space=smem, size = 0x4, offset = 0x4, fixed_abs, tag = 'smem constant byte address 0x4 - core index']
  #allocation1 [shape = 'u32[144,128]{1,0:T(1,128)}', space=vmem, size = 0x12000, scoped, tag = 'internal scratch']
  %s0 = inlined_call_operand.hbm [shape: bf16[2,8,128], index: 0, kind: input, shape index: {}]
  %s1 = inlined_call_operand.hbm [shape: bf16[2,8,128], index: 1, kind: input, shape index: {}]
  %s2 = inlined_call_operand.vmem [shape: f32[1,128], index: 2, kind: input, shape index: {}]
  %s3 = inlined_call_operand.vmem [shape: f32[1,128], index: 3, kind: input, shape index: {}]
  %s4 = inlined_call_operand.hbm [shape: bf16[128,384], index: 4, kind: input, shape index: {}]
  %s5 = inlined_call_operand.vmem [shape: bf16[32,128], index: 5, kind: input, shape index: {}]
  %s6 = inlined_call_operand.vmem [shape: f32[1,128], index: 6, kind: input, shape index: {}]
  %s7 = inlined_call_operand.vmem [shape: f32[1,128], index: 7, kind: input, shape index: {}]
  %s8 = inlined_call_operand.vmem [shape: f32[1,128], index: 8, kind: input, shape index: {}]
  %s9 = inlined_call_operand.vmem [shape: f32[1,128], index: 9, kind: input, shape index: {}]
  %s10 = inlined_call_operand.vmem [shape: f32[1,128], index: 10, kind: input, shape index: {}]
  %s11 = inlined_call_operand.hbm [shape: bf16[128,128], index: 11, kind: input, shape index: {}]
  %s12 = inlined_call_operand.hbm [shape: bf16[128,128], index: 12, kind: input, shape index: {}]
  %s13 = inlined_call_operand.vmem [shape: f32[1,128], index: 13, kind: input, shape index: {}]
  %s14 = inlined_call_operand.hbm [shape: f32[2,8,128], index: 14, kind: output, shape index: {}]
  %s15 = sld [smem:[#allocation0]]
  $region109: #{tpu_custom_call.1} parent=0
    _
  %s17 = ssub.s32 1, %s15
  %s18 = scalar_select 0, %s17, %s15
  $region1: #{tpu_custom_call.1} parent=0
    #allocation2 [shape = 'u8[4096]{0}', space=vmem, size = 0x1000, scoped, tag = 'input window, operand 0']
    #allocation3 [shape = 's32[2]{0}', space=sflag, size = 0x8, scoped, tag = 'scoped memory for tpu_custom_call.1']
    #allocation4 [shape = 's32[2]{0}', space=sflag, size = 0x8, scoped, tag = 'scoped memory for tpu_custom_call.1']
    #allocation5 [shape = 'u8[4096]{0}', space=vmem, size = 0x1000, scoped, tag = 'input window, operand 1']
    #allocation6 [shape = 's32[2]{0}', space=sflag, size = 0x8, scoped, tag = 'scoped memory for tpu_custom_call.1']
    #allocation7 [shape = 'u8[98304]{0}', space=vmem, size = 0x18000, scoped, tag = 'input window, operand 4, single buffered']
    #allocation8 [shape = 'u8[32768]{0}', space=vmem, size = 0x8000, scoped, tag = 'input window, operand 11, single buffered']
    #allocation9 [shape = 's32[1]{0}', space=sflag, size = 0x4, scoped, tag = 'scoped memory for tpu_custom_call.1']
    #allocation10 [shape = 'u8[32768]{0}', space=vmem, size = 0x8000, scoped, tag = 'input window, operand 12, single buffered']
    #allocation11 [shape = 'u8[8192]{0}', space=vmem, size = 0x2000, scoped, tag = 'output window, operand 0']
    %19 = vsyncpa [#allocation3], 0
    %s20 = scalar_lea.sflag [#allocation3], 1
    %21 = vsyncpa %s20, 0
    %22 = vsyncpa [#allocation6], 0
    %s23 = scalar_lea.sflag [#allocation6], 1
    %24 = vsyncpa %s23, 0
    %25 = vsyncpa [#allocation9], 0
    %26 = vsyncpa [#allocation4], 0
    %s27 = scalar_lea.sflag [#allocation4], 1
    %28 = vsyncpa %s27, 0
    loop: start=0, step=1, limit=4
    $region2: #{tpu_custom_call.1} parent=1 // loop_pre_header
      _
    $region3: #{tpu_custom_call.1} parent=1 // loop_header
      %s30 = sphi 0, %s34
      %p31 = scmp.ge.s32.totalorder %s30, 4
      %s40 = sphi 0, %s42
      %s43 = sphi 0, %s40
      %s44 = sphi 0, %s43
      %s60 = sphi 0, %s44
      %s66 = sphi 0, %s68
      %s69 = sphi 0, %s66
      %s70 = sphi 0, %s69
      %s86 = sphi 0, %s70
      %s90 = sphi 0, %s90
      %s92 = sphi 0, %s90
      %s93 = sphi 0, %s92
      %s107 = sphi 0, %s93
      %s111 = sphi 0, %s111
      %s113 = sphi 0, %s111
      %s114 = sphi 0, %s113
      %s128 = sphi 0, %s114
      %s132 = sphi 0, %s132
      %s134 = sphi 0, %s132
      %s135 = sphi 0, %s134
      %s149 = sphi 0, %s135
      %s153 = sphi 0, %s153
      %s155 = sphi 0, %s153
      %s156 = sphi 0, %s155
      %s170 = sphi 0, %s156
      %s174 = sphi 0, %s174
      %s176 = sphi 0, %s174
      %s177 = sphi 0, %s176
      %s191 = sphi 0, %s177
      %s195 = sphi 0, %s195
      %s197 = sphi 0, %s195
      %s198 = sphi 0, %s197
      %s212 = sphi 0, %s198
      %s216 = sphi 0, %s216
      %s218 = sphi 0, %s216
      %s219 = sphi 0, %s218
      %s233 = sphi 0, %s219
      %s237 = sphi 0, %s237
      %s239 = sphi 0, %s237
      %s240 = sphi 0, %s239
      %s254 = sphi 0, %s240
      %s258 = sphi 0, %s258
      %s260 = sphi 0, %s258
      %s261 = sphi 0, %s260
      %s275 = sphi 0, %s261
      %s279 = sphi 0, %s279
      %s281 = sphi 0, %s279
      %s282 = sphi 0, %s281
      %s296 = sphi 0, %s282
      %s300 = sphi 0, %s300
      %s302 = sphi 0, %s300
      %s303 = sphi 0, %s302
      %s317 = sphi 0, %s303
      %s321 = sphi 0, %s321
      %s323 = sphi 0, %s321
      %s324 = sphi 0, %s323
      %s338 = sphi 0, %s324
      %s344 = sphi 0, %s346
      %s347 = sphi 0, %s344
      %s348 = sphi 0, %s347
      %s364 = sphi 0, %s348
    $region4: #{tpu_custom_call.1} parent=1 // loop_header_branch
      %33 = sbr.rel (%p31) target = $region8
    $region5: #{tpu_custom_call.1} parent=1 // loop_body
      %s35 = ssub.s32 %s30, 1
      %s36 = ssub.s32 %s30, 2
      %s37 = sadd.s32 %s30, 1
      %s38 = ssub.s32 %s30, %s37
      %p39 = scmp.eq.s32.totalorder %s38, 0
      %s41 = sadd.s32 %s40, 1
      %s42 = scalar_select %p39, %s40, %s41
      %p45 = pneg %p39
      %p46 = scmp.eq.s32.totalorder %s30, 1
      %p47 = por %p45, %p46
      %p48 = scmp.ne.s32.totalorder %s40, %s43
      %p49 = scmp.eq.s32.totalorder %s30, 0
      %p50 = por %p48, %p49
      %p51 = scmp.ne.s32.totalorder %s40, %s43
      %p52 = scmp.eq.s32.totalorder %s35, 1
      %p53 = por %p51, %p52
      %p54 = scmp.ne.s32.totalorder %s43, %s44
      %p55 = scmp.eq.s32.totalorder %s35, 0
      %p56 = por %p54, %p55
      %p57 = scmp.ne.s32.totalorder %s43, %s44
      %p58 = scmp.eq.s32.totalorder %s36, 1
      %p59 = por %p57, %p58
      %p61 = scmp.ne.s32.totalorder %s44, %s60
      %p62 = scmp.eq.s32.totalorder %s36, 0
      %p63 = por %p61, %p62
      %s64 = ssub.s32 %s30, %s37
      %p65 = scmp.eq.s32.totalorder %s64, 0
      %s67 = sadd.s32 %s66, 1
      %s68 = scalar_select %p65, %s66, %s67
      %p71 = pneg %p65
      %p72 = scmp.eq.s32.totalorder %s30, 1
      %p73 = por %p71, %p72
      %p74 = scmp.ne.s32.totalorder %s66, %s69
      %p75 = scmp.eq.s32.totalorder %s30, 0
      %p76 = por %p74, %p75
      %p77 = scmp.ne.s32.totalorder %s66, %s69
      %p78 = scmp.eq.s32.totalorder %s35, 1
      %p79 = por %p77, %p78
      %p80 = scmp.ne.s32.totalorder %s69, %s70
      %p81 = scmp.eq.s32.totalorder %s35, 0
      %p82 = por %p80, %p81
      %p83 = scmp.ne.s32.totalorder %s69, %s70
      %p84 = scmp.eq.s32.totalorder %s36, 1
      %p85 = por %p83, %p84
      %p87 = scmp.ne.s32.totalorder %s70, %s86
      %p88 = scmp.eq.s32.totalorder %s36, 0
      %p89 = por %p87, %p88
      %s91 = sadd.s32 %s90, 1
      %p94 = scmp.eq.s32.totalorder %s30, 1
      %p95 = scmp.ne.s32.totalorder %s90, %s92
      %p96 = scmp.eq.s32.totalorder %s30, 0
      %p97 = por %p95, %p96
      %p98 = scmp.ne.s32.totalorder %s90, %s92
      %p99 = scmp.eq.s32.totalorder %s35, 1
      %p100 = por %p98, %p99
      %p101 = scmp.ne.s32.totalorder %s92, %s93
      %p102 = scmp.eq.s32.totalorder %s35, 0
      %p103 = por %p101, %p102
      %p104 = scmp.ne.s32.totalorder %s92, %s93
      %p105 = scmp.eq.s32.totalorder %s36, 1
      %p106 = por %p104, %p105
      %p108 = scmp.ne.s32.totalorder %s93, %s107
      %p109 = scmp.eq.s32.totalorder %s36, 0
      %p110 = por %p108, %p109
      %s112 = sadd.s32 %s111, 1
      %p115 = scmp.eq.s32.totalorder %s30, 1
      %p116 = scmp.ne.s32.totalorder %s111, %s113
      %p117 = scmp.eq.s32.totalorder %s30, 0
      %p118 = por %p116, %p117
      %p119 = scmp.ne.s32.totalorder %s111, %s113
      %p120 = scmp.eq.s32.totalorder %s35, 1
      %p121 = por %p119, %p120
      %p122 = scmp.ne.s32.totalorder %s113, %s114
      %p123 = scmp.eq.s32.totalorder %s35, 0
      %p124 = por %p122, %p123
      %p125 = scmp.ne.s32.totalorder %s113, %s114
      %p126 = scmp.eq.s32.totalorder %s36, 1
      %p127 = por %p125, %p126
      %p129 = scmp.ne.s32.totalorder %s114, %s128
      %p130 = scmp.eq.s32.totalorder %s36, 0
      %p131 = por %p129, %p130
      %s133 = sadd.s32 %s132, 1
      %p136 = scmp.eq.s32.totalorder %s30, 1
      %p137 = scmp.ne.s32.totalorder %s132, %s134
      %p138 = scmp.eq.s32.totalorder %s30, 0
      %p139 = por %p137, %p138
      %p140 = scmp.ne.s32.totalorder %s132, %s134
      %p141 = scmp.eq.s32.totalorder %s35, 1
      %p142 = por %p140, %p141
      %p143 = scmp.ne.s32.totalorder %s134, %s135
      %p144 = scmp.eq.s32.totalorder %s35, 0
      %p145 = por %p143, %p144
      %p146 = scmp.ne.s32.totalorder %s134, %s135
      %p147 = scmp.eq.s32.totalorder %s36, 1
      %p148 = por %p146, %p147
      %p150 = scmp.ne.s32.totalorder %s135, %s149
      %p151 = scmp.eq.s32.totalorder %s36, 0
      %p152 = por %p150, %p151
      %s154 = sadd.s32 %s153, 1
      %p157 = scmp.eq.s32.totalorder %s30, 1
      %p158 = scmp.ne.s32.totalorder %s153, %s155
      %p159 = scmp.eq.s32.totalorder %s30, 0
      %p160 = por %p158, %p159
      %p161 = scmp.ne.s32.totalorder %s153, %s155
      %p162 = scmp.eq.s32.totalorder %s35, 1
      %p163 = por %p161, %p162
      %p164 = scmp.ne.s32.totalorder %s155, %s156
      %p165 = scmp.eq.s32.totalorder %s35, 0
      %p166 = por %p164, %p165
      %p167 = scmp.ne.s32.totalorder %s155, %s156
      %p168 = scmp.eq.s32.totalorder %s36, 1
      %p169 = por %p167, %p168
      %p171 = scmp.ne.s32.totalorder %s156, %s170
      %p172 = scmp.eq.s32.totalorder %s36, 0
      %p173 = por %p171, %p172
      %s175 = sadd.s32 %s174, 1
      %p178 = scmp.eq.s32.totalorder %s30, 1
      %p179 = scmp.ne.s32.totalorder %s174, %s176
      %p180 = scmp.eq.s32.totalorder %s30, 0
      %p181 = por %p179, %p180
      %p182 = scmp.ne.s32.totalorder %s174, %s176
      %p183 = scmp.eq.s32.totalorder %s35, 1
      %p184 = por %p182, %p183
      %p185 = scmp.ne.s32.totalorder %s176, %s177
      %p186 = scmp.eq.s32.totalorder %s35, 0
      %p187 = por %p185, %p186
      %p188 = scmp.ne.s32.totalorder %s176, %s177
      %p189 = scmp.eq.s32.totalorder %s36, 1
      %p190 = por %p188, %p189
      %p192 = scmp.ne.s32.totalorder %s177, %s191
      %p193 = scmp.eq.s32.totalorder %s36, 0
      %p194 = por %p192, %p193
      %s196 = sadd.s32 %s195, 1
      %p199 = scmp.eq.s32.totalorder %s30, 1
      %p200 = scmp.ne.s32.totalorder %s195, %s197
      %p201 = scmp.eq.s32.totalorder %s30, 0
      %p202 = por %p200, %p201
      %p203 = scmp.ne.s32.totalorder %s195, %s197
      %p204 = scmp.eq.s32.totalorder %s35, 1
      %p205 = por %p203, %p204
      %p206 = scmp.ne.s32.totalorder %s197, %s198
      %p207 = scmp.eq.s32.totalorder %s35, 0
      %p208 = por %p206, %p207
      %p209 = scmp.ne.s32.totalorder %s197, %s198
      %p210 = scmp.eq.s32.totalorder %s36, 1
      %p211 = por %p209, %p210
      %p213 = scmp.ne.s32.totalorder %s198, %s212
      %p214 = scmp.eq.s32.totalorder %s36, 0
      %p215 = por %p213, %p214
      %s217 = sadd.s32 %s216, 1
      %p220 = scmp.eq.s32.totalorder %s30, 1
      %p221 = scmp.ne.s32.totalorder %s216, %s218
      %p222 = scmp.eq.s32.totalorder %s30, 0
      %p223 = por %p221, %p222
      %p224 = scmp.ne.s32.totalorder %s216, %s218
      %p225 = scmp.eq.s32.totalorder %s35, 1
      %p226 = por %p224, %p225
      %p227 = scmp.ne.s32.totalorder %s218, %s219
      %p228 = scmp.eq.s32.totalorder %s35, 0
      %p229 = por %p227, %p228
      %p230 = scmp.ne.s32.totalorder %s218, %s219
      %p231 = scmp.eq.s32.totalorder %s36, 1
      %p232 = por %p230, %p231
      %p234 = scmp.ne.s32.totalorder %s219, %s233
      %p235 = scmp.eq.s32.totalorder %s36, 0
      %p236 = por %p234, %p235
      %s238 = sadd.s32 %s237, 1
      %p241 = scmp.eq.s32.totalorder %s30, 1
      %p242 = scmp.ne.s32.totalorder %s237, %s239
      %p243 = scmp.eq.s32.totalorder %s30, 0
      %p244 = por %p242, %p243
      %p245 = scmp.ne.s32.totalorder %s237, %s239
      %p246 = scmp.eq.s32.totalorder %s35, 1
      %p247 = por %p245, %p246
      %p248 = scmp.ne.s32.totalorder %s239, %s240
      %p249 = scmp.eq.s32.totalorder %s35, 0
      %p250 = por %p248, %p249
      %p251 = scmp.ne.s32.totalorder %s239, %s240
      %p252 = scmp.eq.s32.totalorder %s36, 1
      %p253 = por %p251, %p252
      %p255 = scmp.ne.s32.totalorder %s240, %s254
      %p256 = scmp.eq.s32.totalorder %s36, 0
      %p257 = por %p255, %p256
      %s259 = sadd.s32 %s258, 1
      %p262 = scmp.eq.s32.totalorder %s30, 1
      %p263 = scmp.ne.s32.totalorder %s258, %s260
      %p264 = scmp.eq.s32.totalorder %s30, 0
      %p265 = por %p263, %p264
      %p266 = scmp.ne.s32.totalorder %s258, %s260
      %p267 = scmp.eq.s32.totalorder %s35, 1
      %p268 = por %p266, %p267
      %p269 = scmp.ne.s32.totalorder %s260, %s261
      %p270 = scmp.eq.s32.totalorder %s35, 0
      %p271 = por %p269, %p270
      %p272 = scmp.ne.s32.totalorder %s260, %s261
      %p273 = scmp.eq.s32.totalorder %s36, 1
      %p274 = por %p272, %p273
      %p276 = scmp.ne.s32.totalorder %s261, %s275
      %p277 = scmp.eq.s32.totalorder %s36, 0
      %p278 = por %p276, %p277
      %s280 = sadd.s32 %s279, 1
      %p283 = scmp.eq.s32.totalorder %s30, 1
      %p284 = scmp.ne.s32.totalorder %s279, %s281
      %p285 = scmp.eq.s32.totalorder %s30, 0
      %p286 = por %p284, %p285
      %p287 = scmp.ne.s32.totalorder %s279, %s281
      %p288 = scmp.eq.s32.totalorder %s35, 1
      %p289 = por %p287, %p288
      %p290 = scmp.ne.s32.totalorder %s281, %s282
      %p291 = scmp.eq.s32.totalorder %s35, 0
      %p292 = por %p290, %p291
      %p293 = scmp.ne.s32.totalorder %s281, %s282
      %p294 = scmp.eq.s32.totalorder %s36, 1
      %p295 = por %p293, %p294
      %p297 = scmp.ne.s32.totalorder %s282, %s296
      %p298 = scmp.eq.s32.totalorder %s36, 0
      %p299 = por %p297, %p298
      %s301 = sadd.s32 %s300, 1
      %p304 = scmp.eq.s32.totalorder %s30, 1
      %p305 = scmp.ne.s32.totalorder %s300, %s302
      %p306 = scmp.eq.s32.totalorder %s30, 0
      %p307 = por %p305, %p306
      %p308 = scmp.ne.s32.totalorder %s300, %s302
      %p309 = scmp.eq.s32.totalorder %s35, 1
      %p310 = por %p308, %p309
      %p311 = scmp.ne.s32.totalorder %s302, %s303
      %p312 = scmp.eq.s32.totalorder %s35, 0
      %p313 = por %p311, %p312
      %p314 = scmp.ne.s32.totalorder %s302, %s303
      %p315 = scmp.eq.s32.totalorder %s36, 1
      %p316 = por %p314, %p315
      %p318 = scmp.ne.s32.totalorder %s303, %s317
      %p319 = scmp.eq.s32.totalorder %s36, 0
      %p320 = por %p318, %p319
      %s322 = sadd.s32 %s321, 1
      %p325 = scmp.eq.s32.totalorder %s30, 1
      %p326 = scmp.ne.s32.totalorder %s321, %s323
      %p327 = scmp.eq.s32.totalorder %s30, 0
      %p328 = por %p326, %p327
      %p329 = scmp.ne.s32.totalorder %s321, %s323
      %p330 = scmp.eq.s32.totalorder %s35, 1
      %p331 = por %p329, %p330
      %p332 = scmp.ne.s32.totalorder %s323, %s324
      %p333 = scmp.eq.s32.totalorder %s35, 0
      %p334 = por %p332, %p333
      %p335 = scmp.ne.s32.totalorder %s323, %s324
      %p336 = scmp.eq.s32.totalorder %s36, 1
      %p337 = por %p335, %p336
      %p339 = scmp.ne.s32.totalorder %s324, %s338
      %p340 = scmp.eq.s32.totalorder %s36, 0
      %p341 = por %p339, %p340
      %s342 = ssub.s32 %s30, %s37
      %p343 = scmp.eq.s32.totalorder %s342, 0
      %s345 = sadd.s32 %s344, 1
      %s346 = scalar_select %p343, %s344, %s345
      %p349 = pneg %p343
      %p350 = scmp.eq.s32.totalorder %s30, 1
      %p351 = por %p349, %p350
      %p352 = scmp.ne.s32.totalorder %s344, %s347
      %p353 = scmp.eq.s32.totalorder %s30, 0
      %p354 = por %p352, %p353
      %p355 = scmp.ne.s32.totalorder %s344, %s347
      %p356 = scmp.eq.s32.totalorder %s35, 1
      %p357 = por %p355, %p356
      %p358 = scmp.ne.s32.totalorder %s347, %s348
      %p359 = scmp.eq.s32.totalorder %s35, 0
      %p360 = por %p358, %p359
      %p361 = scmp.ne.s32.totalorder %s347, %s348
      %p362 = scmp.eq.s32.totalorder %s36, 1
      %p363 = por %p361, %p362
      %p365 = scmp.ne.s32.totalorder %s348, %s364
      %p366 = scmp.eq.s32.totalorder %s36, 0
      %p367 = por %p365, %p366
      %p368 = scmp.le.s32.totalorder 1, %s30
      %p369 = scmp.lt.s32.totalorder %s30, 3
      %p370 = pnand %p368, %p369
      %p371 = pneg %p370
      // Predicated region
      $region9: #{tpu_custom_call.1} parent=5 // pred_check
        _
      $region10: #{tpu_custom_call.1} parent=5 // pred_check_branch
        %373 = sbr.rel (%p370) target = $region12
      $region11: #{tpu_custom_call.1} parent=5 // pred_region
        %s374 = ssub.s32 %s30, 1
        // Predicated region
        $region13: #{tpu_custom_call.1} parent=11 // pred_check
          %p375 = pneg %p103
        $region14: #{tpu_custom_call.1} parent=11 // pred_check_branch
          %377 = sbr.rel (%p375) target = $region16
        $region15: #{tpu_custom_call.1} parent=11 // pred_region
          _
        $region16: #{tpu_custom_call.1} parent=11 // pred_fallthru
          _
        // Predicated region
        $region17: #{tpu_custom_call.1} parent=11 // pred_check
          %p378 = pneg %p124
        $region18: #{tpu_custom_call.1} parent=11 // pred_check_branch
          %380 = sbr.rel (%p378) target = $region20
        $region19: #{tpu_custom_call.1} parent=11 // pred_region
          _
        $region20: #{tpu_custom_call.1} parent=11 // pred_fallthru
          _
        // Predicated region
        $region21: #{tpu_custom_call.1} parent=11 // pred_check
          %p381 = pneg %p145
        $region22: #{tpu_custom_call.1} parent=11 // pred_check_branch
          %383 = sbr.rel (%p381) target = $region24
        $region23: #{tpu_custom_call.1} parent=11 // pred_region
          %s385 = ssub.s32 3072, 3072
          %386 = vsyncadd [#allocation6], %s385
          %s387 = sshll.u32 [#allocation7], 4
          %s388 = int_to_ptr.vmem [resolvable:$true] %s387
          %393 = dma.hbm_to_vmem [thread:$0]  %s4, 3072, %s388, [#allocation6], 192, 192, 12
        $region24: #{tpu_custom_call.1} parent=11 // pred_fallthru
          _
        // Predicated region
        $region25: #{tpu_custom_call.1} parent=11 // pred_check
          %p394 = pneg %p166
        $region26: #{tpu_custom_call.1} parent=11 // pred_check_branch
          %396 = sbr.rel (%p394) target = $region28
        $region27: #{tpu_custom_call.1} parent=11 // pred_region
          _
        $region28: #{tpu_custom_call.1} parent=11 // pred_fallthru
          _
        // Predicated region
        $region29: #{tpu_custom_call.1} parent=11 // pred_check
          %p397 = pneg %p187
        $region30: #{tpu_custom_call.1} parent=11 // pred_check_branch
          %399 = sbr.rel (%p397) target = $region32
        $region31: #{tpu_custom_call.1} parent=11 // pred_region
          _
        $region32: #{tpu_custom_call.1} parent=11 // pred_fallthru
          _
        // Predicated region
        $region33: #{tpu_custom_call.1} parent=11 // pred_check
          %p400 = pneg %p208
        $region34: #{tpu_custom_call.1} parent=11 // pred_check_branch
          %402 = sbr.rel (%p400) target = $region36
        $region35: #{tpu_custom_call.1} parent=11 // pred_region
          _
        $region36: #{tpu_custom_call.1} parent=11 // pred_fallthru
          _
        // Predicated region
        $region37: #{tpu_custom_call.1} parent=11 // pred_check
          %p403 = pneg %p229
        $region38: #{tpu_custom_call.1} parent=11 // pred_check_branch
          %405 = sbr.rel (%p403) target = $region40
        $region39: #{tpu_custom_call.1} parent=11 // pred_region
          _
        $region40: #{tpu_custom_call.1} parent=11 // pred_fallthru
          _
        // Predicated region
        $region41: #{tpu_custom_call.1} parent=11 // pred_check
          %p406 = pneg %p250
        $region42: #{tpu_custom_call.1} parent=11 // pred_check_branch
          %408 = sbr.rel (%p406) target = $region44
        $region43: #{tpu_custom_call.1} parent=11 // pred_region
          _
        $region44: #{tpu_custom_call.1} parent=11 // pred_fallthru
          _
        // Predicated region
        $region45: #{tpu_custom_call.1} parent=11 // pred_check
          %p409 = pneg %p271
        $region46: #{tpu_custom_call.1} parent=11 // pred_check_branch
          %411 = sbr.rel (%p409) target = $region48
        $region47: #{tpu_custom_call.1} parent=11 // pred_region
          _
        $region48: #{tpu_custom_call.1} parent=11 // pred_fallthru
          _
        // Predicated region
        $region49: #{tpu_custom_call.1} parent=11 // pred_check
          %p412 = pneg %p292
        $region50: #{tpu_custom_call.1} parent=11 // pred_check_branch
          %414 = sbr.rel (%p412) target = $region52
        $region51: #{tpu_custom_call.1} parent=11 // pred_region
          %s416 = ssub.s32 1024, 1024
          %417 = vsyncadd [#allocation9], %s416
          %s418 = sshll.u32 [#allocation8], 4
          %s419 = int_to_ptr.vmem [resolvable:$true] %s418
          %424 = dma.hbm_to_vmem [thread:$0]  %s11, 1024, %s419, [#allocation9], 64, 64, 4
        $region52: #{tpu_custom_call.1} parent=11 // pred_fallthru
          _
        // Predicated region
        $region53: #{tpu_custom_call.1} parent=11 // pred_check
          %p425 = pneg %p313
        $region54: #{tpu_custom_call.1} parent=11 // pred_check_branch
          %427 = sbr.rel (%p425) target = $region56
        $region55: #{tpu_custom_call.1} parent=11 // pred_region
          %s429 = ssub.s32 1024, 1024
          %430 = vsyncadd [#allocation9], %s429
          %s431 = sshll.u32 [#allocation10], 4
          %s432 = int_to_ptr.vmem [resolvable:$true] %s431
          %437 = dma.hbm_to_vmem [thread:$0]  %s12, 1024, %s432, [#allocation9], 64, 64, 4
        $region56: #{tpu_custom_call.1} parent=11 // pred_fallthru
          _
        // Predicated region
        $region57: #{tpu_custom_call.1} parent=11 // pred_check
          %p438 = pneg %p334
        $region58: #{tpu_custom_call.1} parent=11 // pred_check_branch
          %440 = sbr.rel (%p438) target = $region60
        $region59: #{tpu_custom_call.1} parent=11 // pred_region
          _
        $region60: #{tpu_custom_call.1} parent=11 // pred_fallthru
          _
      $region12: #{tpu_custom_call.1} parent=5 // pred_fallthru
        _
      %p441 = scmp.lt.s32.totalorder %s30, 2
      // Predicated region
      $region61: #{tpu_custom_call.1} parent=5 // pred_check
        %p442 = pneg %p441
      $region62: #{tpu_custom_call.1} parent=5 // pred_check_branch
        %444 = sbr.rel (%p442) target = $region64
      $region63: #{tpu_custom_call.1} parent=5 // pred_region
        // Predicated region
        $region65: #{tpu_custom_call.1} parent=63 // pred_check
          %p445 = pneg %p50
        $region66: #{tpu_custom_call.1} parent=63 // pred_check_branch
          %447 = sbr.rel (%p445) target = $region68
        $region67: #{tpu_custom_call.1} parent=63 // pred_region
          %s448 = sand.u32 %s40, 1
          %s449 = scalar_lea.sflag [#allocation3], %s448
          %s450 = sand.u32 %s40, 1
          %s451 = smul.addr %s450, 4
          %s452 = scalar_lea.vmem [#allocation2], %s451
          %s454 = ssub.s32 64, 64
          %455 = vsyncadd %s449, %s454
          %s456 = smul.addr %s30, 64
          %s457 = scalar_lea.hbm %s0, %s456
          %s459 = sshll.u32 %s452, 4
          %s460 = int_to_ptr.vmem [resolvable:$true] %s459
          %462 = dma.hbm_to_vmem [thread:$0]  %s457, 64, %s460, %s449
        $region68: #{tpu_custom_call.1} parent=63 // pred_fallthru
          _
        // Predicated region
        $region69: #{tpu_custom_call.1} parent=63 // pred_check
          %p463 = pneg %p76
        $region70: #{tpu_custom_call.1} parent=63 // pred_check_branch
          %465 = sbr.rel (%p463) target = $region72
        $region71: #{tpu_custom_call.1} parent=63 // pred_region
          %s466 = sand.u32 %s30, 1
          %s467 = scalar_lea.sflag [#allocation6], %s466
          %s468 = sand.u32 %s66, 1
          %s469 = smul.addr %s468, 4
          %s470 = scalar_lea.vmem [#allocation5], %s469
          %s472 = ssub.s32 64, 64
          %473 = vsyncadd %s467, %s472
          %s474 = smul.addr %s30, 64
          %s475 = scalar_lea.hbm %s1, %s474
          %s477 = sshll.u32 %s470, 4
          %s478 = int_to_ptr.vmem [resolvable:$true] %s477
          %480 = dma.hbm_to_vmem [thread:$0]  %s475, 64, %s478, %s467
        $region72: #{tpu_custom_call.1} parent=63 // pred_fallthru
          _
      $region64: #{tpu_custom_call.1} parent=5 // pred_fallthru
        _
      %p481 = scmp.le.s32.totalorder 1, %s30
      %p482 = scmp.lt.s32.totalorder %s30, 3
      %p483 = pnand %p481, %p482
      %p484 = pneg %p483
      // Predicated region
      $region73: #{tpu_custom_call.1} parent=5 // pred_check
        _
      $region74: #{tpu_custom_call.1} parent=5 // pred_check_branch
        %486 = sbr.rel (%p483) target = $region76
      $region75: #{tpu_custom_call.1} parent=5 // pred_region
        %s487 = ssub.s32 %s30, 1
        %s488 = sand.u32 %s43, 1
        %s489 = scalar_lea.sflag [#allocation3], %s488
        %s490 = sand.u32 %s43, 1
        %s491 = smul.addr %s490, 4
        %s492 = scalar_lea.vmem [#allocation2], %s491
        // Predicated region
        $region77: #{tpu_custom_call.1} parent=75 // pred_check
          %p493 = pneg %p56
        $region78: #{tpu_custom_call.1} parent=75 // pred_check_branch
          %495 = sbr.rel (%p493) target = $region80
        $region79: #{tpu_custom_call.1} parent=75 // pred_region
          %496 = dma.done %s489, 64
        $region80: #{tpu_custom_call.1} parent=75 // pred_fallthru
          _
        %s497 = sand.u32 %s35, 1
        %s498 = scalar_lea.sflag [#allocation6], %s497
        %s499 = sand.u32 %s69, 1
        %s500 = smul.addr %s499, 4
        %s501 = scalar_lea.vmem [#allocation5], %s500
        // Predicated region
        $region81: #{tpu_custom_call.1} parent=75 // pred_check
          %p502 = pneg %p82
        $region82: #{tpu_custom_call.1} parent=75 // pred_check_branch
          %504 = sbr.rel (%p502) target = $region84
        $region83: #{tpu_custom_call.1} parent=75 // pred_region
          %505 = dma.done %s498, 64
        $region84: #{tpu_custom_call.1} parent=75 // pred_fallthru
          _
        // Predicated region
        $region85: #{tpu_custom_call.1} parent=75 // pred_check
          %p506 = pneg %p145
        $region86: #{tpu_custom_call.1} parent=75 // pred_check_branch
          %508 = sbr.rel (%p506) target = $region88
        $region87: #{tpu_custom_call.1} parent=75 // pred_region
          %509 = dma.done [#allocation6], 3072
        $region88: #{tpu_custom_call.1} parent=75 // pred_fallthru
          _
        // Predicated region
        $region89: #{tpu_custom_call.1} parent=75 // pred_check
          %p510 = pneg %p292
        $region90: #{tpu_custom_call.1} parent=75 // pred_check_branch
          %512 = sbr.rel (%p510) target = $region92
        $region91: #{tpu_custom_call.1} parent=75 // pred_region
          %513 = dma.done [#allocation9], 1024
        $region92: #{tpu_custom_call.1} parent=75 // pred_fallthru
          _
        // Predicated region
        $region93: #{tpu_custom_call.1} parent=75 // pred_check
          %p514 = pneg %p313
        $region94: #{tpu_custom_call.1} parent=75 // pred_check_branch
          %516 = sbr.rel (%p514) target = $region96
        $region95: #{tpu_custom_call.1} parent=75 // pred_region
          %517 = dma.done [#allocation9], 1024
        $region96: #{tpu_custom_call.1} parent=75 // pred_fallthru
          _
        %s518 = sand.u32 %s43, 1
        %s519 = scalar_lea.sflag [#allocation3], %s518
        %s520 = sand.u32 %s43, 1
        %s521 = smul.addr %s520, 4
        %s522 = scalar_lea.vmem [#allocation2], %s521
        %p523 = pneg %p56
        %p524 = pneg %p53
        %s525 = sand.u32 %s35, 1
        %s526 = scalar_lea.sflag [#allocation6], %s525
        %s527 = sand.u32 %s69, 1
        %s528 = smul.addr %s527, 4
        %s529 = scalar_lea.vmem [#allocation5], %s528
        %p530 = pneg %p82
        %p531 = pneg %p79
        %p532 = pneg %p103
        %p533 = pneg %p100
        %p534 = pneg %p124
        %p535 = pneg %p121
        %p536 = pneg %p145
        %p537 = pneg %p142
        %p538 = pneg %p166
        %p539 = pneg %p163
        %p540 = pneg %p187
        %p541 = pneg %p184
        %p542 = pneg %p208
        %p543 = pneg %p205
        %p544 = pneg %p229
        %p545 = pneg %p226
        %p546 = pneg %p250
        %p547 = pneg %p247
        %p548 = pneg %p271
        %p549 = pneg %p268
        %p550 = pneg %p292
        %p551 = pneg %p289
        %p552 = pneg %p313
        %p553 = pneg %p310
        %p554 = pneg %p334
        %p555 = pneg %p331
        %p556 = pneg %p360
        %p557 = pneg %p357
        %s558 = sand.u32 %s347, 1
        %s559 = scalar_lea.sflag [#allocation4], %s558
        %s560 = sand.u32 %s347, 1
        %s561 = smul.addr %s560, 8
        %s562 = scalar_lea.vmem [#allocation11], %s561
        %v564 = vld [vmem:[%s492] sm:$0xf]
        %v565 = vunpack.c.l.bf16 %v564
        %v566 = vld [vmem:[%s501] sm:$0xf]
        %v567 = vunpack.c.l.bf16 %v566
        %v568 = vlaneseq
        %v569 = vand.u32 %v568, 127
        %vm570 = vcmp.lt.s32.totalorder %v569, 32
        %v571 = vsel %vm570, 1, 0
        %v572 = vcvt.s32.f32 %v571
        %v573 = vld [vmem:[%s2] sm:$0x1]
        %v574 = vld [vmem:[%s3] sm:$0x1]
        %575 = vadd.xlane.f32.xlu0 %v565
        %v576 = vpop.xlane.xlu0 %575
        %v577 = vmul.f32 %v576, 0.03125
        %v578 = vsub.f32 %v565, %v577
        %v579 = vmul.f32 %v578, %v572
        %v580 = vmul.f32 %v579, %v579
        %581 = vadd.xlane.f32.xlu0 %v580
        %v582 = vpop.xlane.xlu0 %581
        %v583 = vmul.f32 %v582, 0.03125
        %v584 = vadd.f32 %v583, 1e-05
        %v585 = vrsqrt.pop %v584
        %v586 = vmul.f32 %v579, %v585
        %v588 = vlaneseq
        %v589 = vshrl.u32 %v588, 7
        %v590 = vsub.s32 0, %v589
        %v591 = vrot.slane %v573, %v590
        %v593 = vmul.f32 %v586, %v591
        %v595 = vlaneseq
        %v596 = vshrl.u32 %v595, 7
        %v597 = vsub.s32 0, %v596
        %v598 = vrot.slane %v574, %v597
        %v600 = vadd.f32 %v593, %v598
        %v601 = vpack.c.bf16 %v600, %v600
        %v602 = vld [vmem:[#allocation7] sm:$0xff]
        %v603 = vld [vmem:[#allocation7 + $0x8] sm:$0xf]
        %v604 = vld [vmem:[#allocation7 + $0xc] sm:$0xff]
        %v605 = vld [vmem:[#allocation7 + $0x14] sm:$0xf]
        %v606 = vld [vmem:[#allocation7 + $0x18] sm:$0xff]
        %v607 = vld [vmem:[#allocation7 + $0x20] sm:$0xf]
        %v608 = vld [vmem:[#allocation7 + $0x24] sm:$0xff]
        %v609 = vld [vmem:[#allocation7 + $0x2c] sm:$0xf]
        %v610 = vld [vmem:[#allocation7 + $0x30] sm:$0xff]
        %v611 = vld [vmem:[#allocation7 + $0x38] sm:$0xf]
        %v612 = vld [vmem:[#allocation7 + $0x3c] sm:$0xff]
        %v613 = vld [vmem:[#allocation7 + $0x44] sm:$0xf]
        %v614 = vld [vmem:[#allocation7 + $0x48] sm:$0xff]
        %v615 = vld [vmem:[#allocation7 + $0x50] sm:$0xf]
        %v616 = vld [vmem:[#allocation7 + $0x54] sm:$0xff]
        %v617 = vld [vmem:[#allocation7 + $0x5c] sm:$0xf]
        %v618 = vld [vmem:[#allocation7 + $0x60] sm:$0xff]
        %v619 = vld [vmem:[#allocation7 + $0x68] sm:$0xf]
        %v620 = vld [vmem:[#allocation7 + $0x6c] sm:$0xff]
        %v621 = vld [vmem:[#allocation7 + $0x74] sm:$0xf]
        %v622 = vld [vmem:[#allocation7 + $0x78] sm:$0xff]
        %v623 = vld [vmem:[#allocation7 + $0x80] sm:$0xf]
        %v624 = vld [vmem:[#allocation7 + $0x84] sm:$0xff]
        %v625 = vld [vmem:[#allocation7 + $0x8c] sm:$0xf]
        %v626 = vld [vmem:[#allocation7 + $0x90] sm:$0xff]
        %v627 = vld [vmem:[#allocation7 + $0x98] sm:$0xf]
        %v628 = vld [vmem:[#allocation7 + $0x9c] sm:$0xff]
        %v629 = vld [vmem:[#allocation7 + $0xa4] sm:$0xf]
        %v630 = vld [vmem:[#allocation7 + $0xa8] sm:$0xff]
        %v631 = vld [vmem:[#allocation7 + $0xb0] sm:$0xf]
        %v632 = vld [vmem:[#allocation7 + $0xb4] sm:$0xff]
        %v633 = vld [vmem:[#allocation7 + $0xbc] sm:$0xf]
        %v666 = vunpack.c.l.b16 %v602
        %v667 = vunpack.c.h.b16 %v602
        %v668 = vunpack.c.l.b16 %v603
        %v669 = vunpack.c.l.b16 %v604
        %v670 = vunpack.c.h.b16 %v604
        %v671 = vunpack.c.l.b16 %v605
        %v672 = vunpack.c.l.b16 %v606
        %v673 = vunpack.c.h.b16 %v606
        %v674 = vunpack.c.l.b16 %v607
        %v675 = vunpack.c.l.b16 %v608
        %v676 = vunpack.c.h.b16 %v608
        %v677 = vunpack.c.l.b16 %v609
        %v678 = vunpack.c.l.b16 %v610
        %v679 = vunpack.c.h.b16 %v610
        %v680 = vunpack.c.l.b16 %v611
        %v681 = vunpack.c.l.b16 %v612
        %v682 = vunpack.c.h.b16 %v612
        %v683 = vunpack.c.l.b16 %v613
        %v684 = vunpack.c.l.b16 %v614
        %v685 = vunpack.c.h.b16 %v614
        %v686 = vunpack.c.l.b16 %v615
        %v687 = vunpack.c.l.b16 %v616
        %v688 = vunpack.c.h.b16 %v616
        %v689 = vunpack.c.l.b16 %v617
        %v690 = vunpack.c.l.b16 %v618
        %v691 = vunpack.c.h.b16 %v618
        %v692 = vunpack.c.l.b16 %v619
        %v693 = vunpack.c.l.b16 %v620
        %v694 = vunpack.c.h.b16 %v620
        %v695 = vunpack.c.l.b16 %v621
        %v696 = vunpack.c.l.b16 %v622
        %v697 = vunpack.c.h.b16 %v622
        %v698 = vunpack.c.l.b16 %v623
        %v699 = vunpack.c.l.b16 %v624
        %v700 = vunpack.c.h.b16 %v624
        %v701 = vunpack.c.l.b16 %v625
        %v702 = vunpack.c.l.b16 %v626
        %v703 = vunpack.c.h.b16 %v626
        %v704 = vunpack.c.l.b16 %v627
        %v705 = vunpack.c.l.b16 %v628
        %v706 = vunpack.c.h.b16 %v628
        %v707 = vunpack.c.l.b16 %v629
        %v708 = vunpack.c.l.b16 %v630
        %v709 = vunpack.c.h.b16 %v630
        %v710 = vunpack.c.l.b16 %v631
        %v711 = vunpack.c.l.b16 %v632
        %v712 = vunpack.c.h.b16 %v632
        %v713 = vunpack.c.l.b16 %v633
        %v714 = vpack.c.b16 %v669, %v666
        %v715 = vpack.c.b16 %v670, %v667
        %v716 = vpack.c.b16 %v671, %v668
        %v717 = vpack.c.b16 %v675, %v672
        %v718 = vpack.c.b16 %v676, %v673
        %v719 = vpack.c.b16 %v677, %v674
        %v720 = vpack.c.b16 %v681, %v678
        %v721 = vpack.c.b16 %v682, %v679
        %v722 = vpack.c.b16 %v683, %v680
        %v723 = vpack.c.b16 %v687, %v684
        %v724 = vpack.c.b16 %v688, %v685
        %v725 = vpack.c.b16 %v689, %v686
        %v726 = vpack.c.b16 %v693, %v690
        %v727 = vpack.c.b16 %v694, %v691
        %v728 = vpack.c.b16 %v695, %v692
        %v729 = vpack.c.b16 %v699, %v696
        %v730 = vpack.c.b16 %v700, %v697
        %v731 = vpack.c.b16 %v701, %v698
        %v732 = vpack.c.b16 %v705, %v702
        %v733 = vpack.c.b16 %v706, %v703
        %v734 = vpack.c.b16 %v707, %v704
        %v735 = vpack.c.b16 %v711, %v708
        %v736 = vpack.c.b16 %v712, %v709
        %v737 = vpack.c.b16 %v713, %v710
        %762 = vmatprep.subr.bf16.mxu0 %v715
        %763 = vmatpush1.bf16.msra.mxu0 %v714
        %764 = vmatprep.subr.bf16.mxu0 %v718
        %765 = vmatpush1.bf16.msra.mxu0 %v717
        %766 = vmatprep.subr.bf16.mxu0 %v721
        %767 = vmatpush1.bf16.msra.mxu0 %v720
        %768 = vmatprep.subr.bf16.mxu0 %v724
        %769 = vmatpush1.bf16.msra.mxu0 %v723
        %770 = vmatprep.subr.bf16.mxu0 %v727
        %771 = vmatpush1.bf16.msra.mxu0 %v726
        %772 = vmatprep.subr.bf16.mxu0 %v730
        %773 = vmatpush1.bf16.msra.mxu0 %v729
        %774 = vmatprep.subr.bf16.mxu0 %v733
        %775 = vmatpush1.bf16.msra.mxu0 %v732
        %776 = vmatprep.subr.bf16.mxu0 %v736
        %777 = vmatpush1.bf16.msra.mxu0 %v735
        %778 = vmatprep.subr.bf16.mxu0 0
        %779 = vmatpush1.bf16.msra.mxu0 0
        %780 = vmatprep.subr.bf16.mxu0 0
        %781 = vmatpush1.bf16.msra.mxu0 0
        %782 = vmatprep.subr.bf16.mxu0 0
        %783 = vmatpush1.bf16.msra.mxu0 0
        %784 = vmatprep.subr.bf16.mxu0 0
        %785 = vmatpush1.bf16.msra.mxu0 0
        %786 = vmatprep.subr.bf16.mxu0 0
        %787 = vmatpush1.bf16.msra.mxu0 0
        %788 = vmatprep.subr.bf16.mxu0 0
        %789 = vmatpush1.bf16.msra.mxu0 0
        %790 = vmatprep.subr.bf16.mxu0 0
        %791 = vmatpush1.bf16.msra.mxu0 0
        %792 = vmatprep.subr.bf16.mxu0 0
        %793 = vmatpush1.bf16.msra.mxu0 0
        %794 = vmatprep.mubr.bf16.mxu0 0
        %795 = vmatmul.mubr.bf16.gmra.mrb[0].mxu0 %v601
        %v796 = vpop.f32.mrb[0].mxu0
        %v797 = vadd.f32 0.0, %v796
        %v798 = vpop.f32.mrb[0].mxu0
        %v799 = vadd.f32 0.0, %v798
        %v800 = vpop.f32.mrb[0].mxu0
        %v801 = vpop.f32.mrb[0].mxu0
        %802 = vdwg.mxu0
        %803 = vmatprep.subr.bf16.mxu0 0
        %804 = vmatpush1.bf16.msra.mxu0 %v716
        %805 = vmatprep.subr.bf16.mxu0 0
        %806 = vmatpush1.bf16.msra.mxu0 %v719
        %807 = vmatprep.subr.bf16.mxu0 0
        %808 = vmatpush1.bf16.msra.mxu0 %v722
        %809 = vmatprep.subr.bf16.mxu0 0
        %810 = vmatpush1.bf16.msra.mxu0 %v725
        %811 = vmatprep.subr.bf16.mxu0 0
        %812 = vmatpush1.bf16.msra.mxu0 %v728
        %813 = vmatprep.subr.bf16.mxu0 0
        %814 = vmatpush1.bf16.msra.mxu0 %v731
        %815 = vmatprep.subr.bf16.mxu0 0
        %816 = vmatpush1.bf16.msra.mxu0 %v734
        %817 = vmatprep.subr.bf16.mxu0 0
        %818 = vmatpush1.bf16.msra.mxu0 %v737
        %819 = vmatprep.subr.bf16.mxu0 0
        %820 = vmatpush1.bf16.msra.mxu0 0
        %821 = vmatprep.subr.bf16.mxu0 0
        %822 = vmatpush1.bf16.msra.mxu0 0
        %823 = vmatprep.subr.bf16.mxu0 0
        %824 = vmatpush1.bf16.msra.mxu0 0
        %825 = vmatprep.subr.bf16.mxu0 0
        %826 = vmatpush1.bf16.msra.mxu0 0
        %827 = vmatprep.subr.bf16.mxu0 0
        %828 = vmatpush1.bf16.msra.mxu0 0
        %829 = vmatprep.subr.bf16.mxu0 0
        %830 = vmatpush1.bf16.msra.mxu0 0
        %831 = vmatprep.subr.bf16.mxu0 0
        %832 = vmatpush1.bf16.msra.mxu0 0
        %833 = vmatprep.subr.bf16.mxu0 0
        %834 = vmatpush1.bf16.msra.mxu0 0
        %835 = vmatprep.mubr.bf16.mxu0 0
        %836 = vmatmul.mubr.bf16.gmra.mrb[0].mxu0 %v601
        %v837 = vpop.f32.mrb[0].mxu0
        %v838 = vadd.f32 0.0, %v837
        %v839 = vpop.f32.mrb[0].mxu0
        %v840 = vpop.f32.mrb[0].mxu0
        %v841 = vpop.f32.mrb[0].mxu0
        %842 = vdwg.mxu0
        %v843 = vmul.f32 %v797, 0.35355338
        %v844 = vpack.c.bf16 %v843, %v843
        %v845 = vpack.c.bf16 %v799, %v799
        %v846 = vpack.c.bf16 %v838, %v838
        %vm847 = vcmask 64512
        %v849 = vsel %vm847, %v844, 0
        %v852 = vsel %vm847, %v845, 0
        %854 = vmatprep.subr.bf16.mxu0 0
        %855 = vmatpush1.bf16.xpose.msra.mxu0 %v852
        %856 = vmatprep.subr.bf16.mxu0 0
        %857 = vmatpush1.bf16.xpose.msra.mxu0 0
        %858 = vmatprep.subr.bf16.mxu0 0
        %859 = vmatpush1.bf16.xpose.msra.mxu0 0
        %860 = vmatprep.subr.bf16.mxu0 0
        %861 = vmatpush1.bf16.xpose.msra.mxu0 0
        %862 = vmatprep.subr.bf16.mxu0 0
        %863 = vmatpush1.bf16.xpose.msra.mxu0 0
        %864 = vmatprep.subr.bf16.mxu0 0
        %865 = vmatpush1.bf16.xpose.msra.mxu0 0
        %866 = vmatprep.subr.bf16.mxu0 0
        %867 = vmatpush1.bf16.xpose.msra.mxu0 0
        %868 = vmatprep.subr.bf16.mxu0 0
        %869 = vmatpush1.bf16.xpose.msra.mxu0 0
        %870 = vmatprep.subr.bf16.mxu0 0
        %871 = vmatpush1.bf16.xpose.msra.mxu0 0
        %872 = vmatprep.subr.bf16.mxu0 0
        %873 = vmatpush1.bf16.xpose.msra.mxu0 0
        %874 = vmatprep.subr.bf16.mxu0 0
        %875 = vmatpush1.bf16.xpose.msra.mxu0 0
        %876 = vmatprep.subr.bf16.mxu0 0
        %877 = vmatpush1.bf16.xpose.msra.mxu0 0
        %878 = vmatprep.subr.bf16.mxu0 0
        %879 = vmatpush1.bf16.xpose.msra.mxu0 0
        %880 = vmatprep.subr.bf16.mxu0 0
        %881 = vmatpush1.bf16.xpose.msra.mxu0 0
        %882 = vmatprep.subr.bf16.mxu0 0
        %883 = vmatpush1.bf16.xpose.msra.mxu0 0
        %884 = vmatprep.subr.bf16.mxu0 0
        %885 = vmatpush1.bf16.xpose.msra.mxu0 0
        %886 = vmatprep.mubr.bf16.mxu0 0
        %887 = vmatmul.mubr.bf16.gmra.mrb[0].mxu0 %v849
        %v888 = vpop.f32.mrb[0].mxu0
        %v889 = vadd.f32 0.0, %v888
        %v890 = vpop.f32.mrb[0].mxu0
        %v891 = vpop.f32.mrb[0].mxu0
        %v892 = vpop.f32.mrb[0].mxu0
        %893 = vdwg.mxu0
        %v894 = vsel %vm847, %v889, -inf
        %895 = vmax.xlane.f32.xlu0 %v894
        %v896 = vpop.xlane.xlu0 %895
        %v897 = vsub.f32 %v889, %v896
        %v898 = vmul.f32 %v897, 1.442695
        %v899 = vpow.pop %v898
        %v900 = vsel %vm847, %v899, 0.0
        %901 = vadd.xlane.f32.xlu0 %v900
        %v902 = vpop.xlane.xlu0 %901
        %v903 = vrcp.pop %v902
        %v904 = vmul.f32 %v899, %v903
        %v905 = vpack.c.bf16 %v904, %v904
        %v907 = vsel %vm847, %v905, 0
        %vm909 = vcmask 1043456
        %v911 = vsel %vm909, %v846, 0
        %913 = vmatprep.subr.bf16.mxu0 0
        %914 = vmatpush1.bf16.msra.mxu0 %v911
        %915 = vmatprep.subr.bf16.mxu0 0
        %916 = vmatpush1.bf16.msra.mxu0 0
        %917 = vmatprep.subr.bf16.mxu0 0
        %918 = vmatpush1.bf16.msra.mxu0 0
        %919 = vmatprep.subr.bf16.mxu0 0
        %920 = vmatpush1.bf16.msra.mxu0 0
        %921 = vmatprep.subr.bf16.mxu0 0
        %922 = vmatpush1.bf16.msra.mxu0 0
        %923 = vmatprep.subr.bf16.mxu0 0
        %924 = vmatpush1.bf16.msra.mxu0 0
        %925 = vmatprep.subr.bf16.mxu0 0
        %926 = vmatpush1.bf16.msra.mxu0 0
        %927 = vmatprep.subr.bf16.mxu0 0
        %928 = vmatpush1.bf16.msra.mxu0 0
        %929 = vmatprep.subr.bf16.mxu0 0
        %930 = vmatpush1.bf16.msra.mxu0 0
        %931 = vmatprep.subr.bf16.mxu0 0
        %932 = vmatpush1.bf16.msra.mxu0 0
        %933 = vmatprep.subr.bf16.mxu0 0
        %934 = vmatpush1.bf16.msra.mxu0 0
        %935 = vmatprep.subr.bf16.mxu0 0
        %936 = vmatpush1.bf16.msra.mxu0 0
        %937 = vmatprep.subr.bf16.mxu0 0
        %938 = vmatpush1.bf16.msra.mxu0 0
        %939 = vmatprep.subr.bf16.mxu0 0
        %940 = vmatpush1.bf16.msra.mxu0 0
        %941 = vmatprep.subr.bf16.mxu0 0
        %942 = vmatpush1.bf16.msra.mxu0 0
        %943 = vmatprep.subr.bf16.mxu0 0
        %944 = vmatpush1.bf16.msra.mxu0 0
        %945 = vmatprep.mubr.bf16.mxu0 0
        %946 = vmatmul.mubr.bf16.gmra.mrb[0].mxu0 %v907
        %v947 = vpop.f32.mrb[0].mxu0
        %v948 = vadd.f32 0.0, %v947
        %v949 = vpop.f32.mrb[0].mxu0
        %v950 = vpop.f32.mrb[0].mxu0
        %v951 = vpop.f32.mrb[0].mxu0
        %952 = vdwg.mxu0
        %954 = vrot.lane.b32.xlu0 %v844, 120
        %v955 = vpop.permute.xlu0 %954
        %957 = vrot.lane.b32.xlu0 %v845, 120
        %v958 = vpop.permute.xlu0 %957
        %v960 = vsel %vm847, %v955, 0
        %v963 = vsel %vm847, %v958, 0
        %965 = vmatprep.subr.bf16.mxu0 0
        %966 = vmatpush1.bf16.xpose.msra.mxu0 %v963
        %967 = vmatprep.subr.bf16.mxu0 0
        %968 = vmatpush1.bf16.xpose.msra.mxu0 0
        %969 = vmatprep.subr.bf16.mxu0 0
        %970 = vmatpush1.bf16.xpose.msra.mxu0 0
        %971 = vmatprep.subr.bf16.mxu0 0
        %972 = vmatpush1.bf16.xpose.msra.mxu0 0
        %973 = vmatprep.subr.bf16.mxu0 0
        %974 = vmatpush1.bf16.xpose.msra.mxu0 0
        %975 = vmatprep.subr.bf16.mxu0 0
        %976 = vmatpush1.bf16.xpose.msra.mxu0 0
        %977 = vmatprep.subr.bf16.mxu0 0
        %978 = vmatpush1.bf16.xpose.msra.mxu0 0
        %979 = vmatprep.subr.bf16.mxu0 0
        %980 = vmatpush1.bf16.xpose.msra.mxu0 0
        %981 = vmatprep.subr.bf16.mxu0 0
        %982 = vmatpush1.bf16.xpose.msra.mxu0 0
        %983 = vmatprep.subr.bf16.mxu0 0
        %984 = vmatpush1.bf16.xpose.msra.mxu0 0
        %985 = vmatprep.subr.bf16.mxu0 0
        %986 = vmatpush1.bf16.xpose.msra.mxu0 0
        %987 = vmatprep.subr.bf16.mxu0 0
        %988 = vmatpush1.bf16.xpose.msra.mxu0 0
        %989 = vmatprep.subr.bf16.mxu0 0
        %990 = vmatpush1.bf16.xpose.msra.mxu0 0
        %991 = vmatprep.subr.bf16.mxu0 0
        %992 = vmatpush1.bf16.xpose.msra.mxu0 0
        %993 = vmatprep.subr.bf16.mxu0 0
        %994 = vmatpush1.bf16.xpose.msra.mxu0 0
        %995 = vmatprep.subr.bf16.mxu0 0
        %996 = vmatpush1.bf16.xpose.msra.mxu0 0
        %997 = vmatprep.mubr.bf16.mxu0 0
        %998 = vmatmul.mubr.bf16.gmra.mrb[0].mxu0 %v960
        %v999 = vpop.f32.mrb[0].mxu0
        %v1000 = vadd.f32 0.0, %v999
        %v1001 = vpop.f32.mrb[0].mxu0
        %v1002 = vpop.f32.mrb[0].mxu0
        %v1003 = vpop.f32.mrb[0].mxu0
        %1004 = vdwg.mxu0
        %v1005 = vsel %vm847, %v1000, -inf
        %1006 = vmax.xlane.f32.xlu0 %v1005
        %v1007 = vpop.xlane.xlu0 %1006
        %v1008 = vsub.f32 %v1000, %v1007
        %v1009 = vmul.f32 %v1008, 1.442695
        %v1010 = vpow.pop %v1009
        %v1011 = vsel %vm847, %v1010, 0.0
        %1012 = vadd.xlane.f32.xlu0 %v1011
        %v1013 = vpop.xlane.xlu0 %1012
        %v1014 = vrcp.pop %v1013
        %v1015 = vmul.f32 %v1010, %v1014
        %v1016 = vpack.c.bf16 %v1015, %v1015
        %1018 = vrot.lane.b32.xlu0 %v846, 120
        %v1019 = vpop.permute.xlu0 %1018
        %v1021 = vsel %vm847, %v1016, 0
        %v1024 = vsel %vm909, %v1019, 0
        %1026 = vmatprep.subr.bf16.mxu0 0
        %1027 = vmatpush1.bf16.msra.mxu0 %v1024
        %1028 = vmatprep.subr.bf16.mxu0 0
        %1029 = vmatpush1.bf16.msra.mxu0 0
        %1030 = vmatprep.subr.bf16.mxu0 0
        %1031 = vmatpush1.bf16.msra.mxu0 0
        %1032 = vmatprep.subr.bf16.mxu0 0
        %1033 = vmatpush1.bf16.msra.mxu0 0
        %1034 = vmatprep.subr.bf16.mxu0 0
        %1035 = vmatpush1.bf16.msra.mxu0 0
        %1036 = vmatprep.subr.bf16.mxu0 0
        %1037 = vmatpush1.bf16.msra.mxu0 0
        %1038 = vmatprep.subr.bf16.mxu0 0
        %1039 = vmatpush1.bf16.msra.mxu0 0
        %1040 = vmatprep.subr.bf16.mxu0 0
        %1041 = vmatpush1.bf16.msra.mxu0 0
        %1042 = vmatprep.subr.bf16.mxu0 0
        %1043 = vmatpush1.bf16.msra.mxu0 0
        %1044 = vmatprep.subr.bf16.mxu0 0
        %1045 = vmatpush1.bf16.msra.mxu0 0
        %1046 = vmatprep.subr.bf16.mxu0 0
        %1047 = vmatpush1.bf16.msra.mxu0 0
        %1048 = vmatprep.subr.bf16.mxu0 0
        %1049 = vmatpush1.bf16.msra.mxu0 0
        %1050 = vmatprep.subr.bf16.mxu0 0
        %1051 = vmatpush1.bf16.msra.mxu0 0
        %1052 = vmatprep.subr.bf16.mxu0 0
        %1053 = vmatpush1.bf16.msra.mxu0 0
        %1054 = vmatprep.subr.bf16.mxu0 0
        %1055 = vmatpush1.bf16.msra.mxu0 0
        %1056 = vmatprep.subr.bf16.mxu0 0
        %1057 = vmatpush1.bf16.msra.mxu0 0
        %1058 = vmatprep.mubr.bf16.mxu0 0
        %1059 = vmatmul.mubr.bf16.gmra.mrb[0].mxu0 %v1021
        %v1060 = vpop.f32.mrb[0].mxu0
        %v1061 = vadd.f32 0.0, %v1060
        %v1062 = vpop.f32.mrb[0].mxu0
        %v1063 = vpop.f32.mrb[0].mxu0
        %v1064 = vpop.f32.mrb[0].mxu0
        %1065 = vdwg.mxu0
        %1066 = vrot.lane.b32.xlu0 %v844, 112
        %v1067 = vpop.permute.xlu0 %1066
        %1068 = vrot.lane.b32.xlu0 %v845, 112
        %v1069 = vpop.permute.xlu0 %1068
        %v1071 = vsel %vm847, %v1067, 0
        %v1074 = vsel %vm847, %v1069, 0
        %1076 = vmatprep.subr.bf16.mxu0 0
        %1077 = vmatpush1.bf16.xpose.msra.mxu0 %v1074
        %1078 = vmatprep.subr.bf16.mxu0 0
        %1079 = vmatpush1.bf16.xpose.msra.mxu0 0
        %1080 = vmatprep.subr.bf16.mxu0 0
        %1081 = vmatpush1.bf16.xpose.msra.mxu0 0
        %1082 = vmatprep.subr.bf16.mxu0 0
        %1083 = vmatpush1.bf16.xpose.msra.mxu0 0
        %1084 = vmatprep.subr.bf16.mxu0 0
        %1085 = vmatpush1.bf16.xpose.msra.mxu0 0
        %1086 = vmatprep.subr.bf16.mxu0 0
        %1087 = vmatpush1.bf16.xpose.msra.mxu0 0
        %1088 = vmatprep.subr.bf16.mxu0 0
        %1089 = vmatpush1.bf16.xpose.msra.mxu0 0
        %1090 = vmatprep.subr.bf16.mxu0 0
        %1091 = vmatpush1.bf16.xpose.msra.mxu0 0
        %1092 = vmatprep.subr.bf16.mxu0 0
        %1093 = vmatpush1.bf16.xpose.msra.mxu0 0
        %1094 = vmatprep.subr.bf16.mxu0 0
        %1095 = vmatpush1.bf16.xpose.msra.mxu0 0
        %1096 = vmatprep.subr.bf16.mxu0 0
        %1097 = vmatpush1.bf16.xpose.msra.mxu0 0
        %1098 = vmatprep.subr.bf16.mxu0 0
        %1099 = vmatpush1.bf16.xpose.msra.mxu0 0
        %1100 = vmatprep.subr.bf16.mxu0 0
        %1101 = vmatpush1.bf16.xpose.msra.mxu0 0
        %1102 = vmatprep.subr.bf16.mxu0 0
        %1103 = vmatpush1.bf16.xpose.msra.mxu0 0
        %1104 = vmatprep.subr.bf16.mxu0 0
        %1105 = vmatpush1.bf16.xpose.msra.mxu0 0
        %1106 = vmatprep.subr.bf16.mxu0 0
        %1107 = vmatpush1.bf16.xpose.msra.mxu0 0
        %1108 = vmatprep.mubr.bf16.mxu0 0
        %1109 = vmatmul.mubr.bf16.gmra.mrb[0].mxu0 %v1071
        %v1110 = vpop.f32.mrb[0].mxu0
        %v1111 = vadd.f32 0.0, %v1110
        %v1112 = vpop.f32.mrb[0].mxu0
        %v1113 = vpop.f32.mrb[0].mxu0
        %v1114 = vpop.f32.mrb[0].mxu0
        %1115 = vdwg.mxu0
        %v1116 = vsel %vm847, %v1111, -inf
        %1117 = vmax.xlane.f32.xlu0 %v1116
        %v1118 = vpop.xlane.xlu0 %1117
        %v1119 = vsub.f32 %v1111, %v1118
        %v1120 = vmul.f32 %v1119, 1.442695
        %v1121 = vpow.pop %v1120
        %v1122 = vsel %vm847, %v1121, 0.0
        %1123 = vadd.xlane.f32.xlu0 %v1122
        %v1124 = vpop.xlane.xlu0 %1123
        %v1125 = vrcp.pop %v1124
        %v1126 = vmul.f32 %v1121, %v1125
        %v1127 = vpack.c.bf16 %v1126, %v1126
        %1128 = vrot.lane.b32.xlu0 %v846, 112
        %v1129 = vpop.permute.xlu0 %1128
        %v1131 = vsel %vm847, %v1127, 0
        %v1134 = vsel %vm909, %v1129, 0
        %1136 = vmatprep.subr.bf16.mxu0 0
        %1137 = vmatpush1.bf16.msra.mxu0 %v1134
        %1138 = vmatprep.subr.bf16.mxu0 0
        %1139 = vmatpush1.bf16.msra.mxu0 0
        %1140 = vmatprep.subr.bf16.mxu0 0
        %1141 = vmatpush1.bf16.msra.mxu0 0
        %1142 = vmatprep.subr.bf16.mxu0 0
        %1143 = vmatpush1.bf16.msra.mxu0 0
        %1144 = vmatprep.subr.bf16.mxu0 0
        %1145 = vmatpush1.bf16.msra.mxu0 0
        %1146 = vmatprep.subr.bf16.mxu0 0
        %1147 = vmatpush1.bf16.msra.mxu0 0
        %1148 = vmatprep.subr.bf16.mxu0 0
        %1149 = vmatpush1.bf16.msra.mxu0 0
        %1150 = vmatprep.subr.bf16.mxu0 0
        %1151 = vmatpush1.bf16.msra.mxu0 0
        %1152 = vmatprep.subr.bf16.mxu0 0
        %1153 = vmatpush1.bf16.msra.mxu0 0
        %1154 = vmatprep.subr.bf16.mxu0 0
        %1155 = vmatpush1.bf16.msra.mxu0 0
        %1156 = vmatprep.subr.bf16.mxu0 0
        %1157 = vmatpush1.bf16.msra.mxu0 0
        %1158 = vmatprep.subr.bf16.mxu0 0
        %1159 = vmatpush1.bf16.msra.mxu0 0
        %1160 = vmatprep.subr.bf16.mxu0 0
        %1161 = vmatpush1.bf16.msra.mxu0 0
        %1162 = vmatprep.subr.bf16.mxu0 0
        %1163 = vmatpush1.bf16.msra.mxu0 0
        %1164 = vmatprep.subr.bf16.mxu0 0
        %1165 = vmatpush1.bf16.msra.mxu0 0
        %1166 = vmatprep.subr.bf16.mxu0 0
        %1167 = vmatpush1.bf16.msra.mxu0 0
        %1168 = vmatprep.mubr.bf16.mxu0 0
        %1169 = vmatmul.mubr.bf16.gmra.mrb[0].mxu0 %v1131
        %v1170 = vpop.f32.mrb[0].mxu0
        %v1171 = vadd.f32 0.0, %v1170
        %v1172 = vpop.f32.mrb[0].mxu0
        %v1173 = vpop.f32.mrb[0].mxu0
        %v1174 = vpop.f32.mrb[0].mxu0
        %1175 = vdwg.mxu0
        %1176 = vrot.lane.b32.xlu0 %v844, 104
        %v1177 = vpop.permute.xlu0 %1176
        %1178 = vrot.lane.b32.xlu0 %v845, 104
        %v1179 = vpop.permute.xlu0 %1178
        %v1181 = vsel %vm847, %v1177, 0
        %v1184 = vsel %vm847, %v1179, 0
        %1186 = vmatprep.subr.bf16.mxu0 0
        %1187 = vmatpush1.bf16.xpose.msra.mxu0 %v1184
        %1188 = vmatprep.subr.bf16.mxu0 0
        %1189 = vmatpush1.bf16.xpose.msra.mxu0 0
        %1190 = vmatprep.subr.bf16.mxu0 0
        %1191 = vmatpush1.bf16.xpose.msra.mxu0 0
        %1192 = vmatprep.subr.bf16.mxu0 0
        %1193 = vmatpush1.bf16.xpose.msra.mxu0 0
        %1194 = vmatprep.subr.bf16.mxu0 0
        %1195 = vmatpush1.bf16.xpose.msra.mxu0 0
        %1196 = vmatprep.subr.bf16.mxu0 0
        %1197 = vmatpush1.bf16.xpose.msra.mxu0 0
        %1198 = vmatprep.subr.bf16.mxu0 0
        %1199 = vmatpush1.bf16.xpose.msra.mxu0 0
        %1200 = vmatprep.subr.bf16.mxu0 0
        %1201 = vmatpush1.bf16.xpose.msra.mxu0 0
        %1202 = vmatprep.subr.bf16.mxu0 0
        %1203 = vmatpush1.bf16.xpose.msra.mxu0 0
        %1204 = vmatprep.subr.bf16.mxu0 0
        %1205 = vmatpush1.bf16.xpose.msra.mxu0 0
        %1206 = vmatprep.subr.bf16.mxu0 0
        %1207 = vmatpush1.bf16.xpose.msra.mxu0 0
        %1208 = vmatprep.subr.bf16.mxu0 0
        %1209 = vmatpush1.bf16.xpose.msra.mxu0 0
        %1210 = vmatprep.subr.bf16.mxu0 0
        %1211 = vmatpush1.bf16.xpose.msra.mxu0 0
        %1212 = vmatprep.subr.bf16.mxu0 0
        %1213 = vmatpush1.bf16.xpose.msra.mxu0 0
        %1214 = vmatprep.subr.bf16.mxu0 0
        %1215 = vmatpush1.bf16.xpose.msra.mxu0 0
        %1216 = vmatprep.subr.bf16.mxu0 0
        %1217 = vmatpush1.bf16.xpose.msra.mxu0 0
        %1218 = vmatprep.mubr.bf16.mxu0 0
        %1219 = vmatmul.mubr.bf16.gmra.mrb[0].mxu0 %v1181
        %v1220 = vpop.f32.mrb[0].mxu0
        %v1221 = vadd.f32 0.0, %v1220
        %v1222 = vpop.f32.mrb[0].mxu0
        %v1223 = vpop.f32.mrb[0].mxu0
        %v1224 = vpop.f32.mrb[0].mxu0
        %1225 = vdwg.mxu0
        %v1226 = vsel %vm847, %v1221, -inf
        %1227 = vmax.xlane.f32.xlu0 %v1226
        %v1228 = vpop.xlane.xlu0 %1227
        %v1229 = vsub.f32 %v1221, %v1228
        %v1230 = vmul.f32 %v1229, 1.442695
        %v1231 = vpow.pop %v1230
        %v1232 = vsel %vm847, %v1231, 0.0
        %1233 = vadd.xlane.f32.xlu0 %v1232
        %v1234 = vpop.xlane.xlu0 %1233
        %v1235 = vrcp.pop %v1234
        %v1236 = vmul.f32 %v1231, %v1235
        %v1237 = vpack.c.bf16 %v1236, %v1236
        %1238 = vrot.lane.b32.xlu0 %v846, 104
        %v1239 = vpop.permute.xlu0 %1238
        %v1241 = vsel %vm847, %v1237, 0
        %v1244 = vsel %vm909, %v1239, 0
        %1246 = vmatprep.subr.bf16.mxu0 0
        %1247 = vmatpush1.bf16.msra.mxu0 %v1244
        %1248 = vmatprep.subr.bf16.mxu0 0
        %1249 = vmatpush1.bf16.msra.mxu0 0
        %1250 = vmatprep.subr.bf16.mxu0 0
        %1251 = vmatpush1.bf16.msra.mxu0 0
        %1252 = vmatprep.subr.bf16.mxu0 0
        %1253 = vmatpush1.bf16.msra.mxu0 0
        %1254 = vmatprep.subr.bf16.mxu0 0
        %1255 = vmatpush1.bf16.msra.mxu0 0
        %1256 = vmatprep.subr.bf16.mxu0 0
        %1257 = vmatpush1.bf16.msra.mxu0 0
        %1258 = vmatprep.subr.bf16.mxu0 0
        %1259 = vmatpush1.bf16.msra.mxu0 0
        %1260 = vmatprep.subr.bf16.mxu0 0
        %1261 = vmatpush1.bf16.msra.mxu0 0
        %1262 = vmatprep.subr.bf16.mxu0 0
        %1263 = vmatpush1.bf16.msra.mxu0 0
        %1264 = vmatprep.subr.bf16.mxu0 0
        %1265 = vmatpush1.bf16.msra.mxu0 0
        %1266 = vmatprep.subr.bf16.mxu0 0
        %1267 = vmatpush1.bf16.msra.mxu0 0
        %1268 = vmatprep.subr.bf16.mxu0 0
        %1269 = vmatpush1.bf16.msra.mxu0 0
        %1270 = vmatprep.subr.bf16.mxu0 0
        %1271 = vmatpush1.bf16.msra.mxu0 0
        %1272 = vmatprep.subr.bf16.mxu0 0
        %1273 = vmatpush1.bf16.msra.mxu0 0
        %1274 = vmatprep.subr.bf16.mxu0 0
        %1275 = vmatpush1.bf16.msra.mxu0 0
        %1276 = vmatprep.subr.bf16.mxu0 0
        %1277 = vmatpush1.bf16.msra.mxu0 0
        %1278 = vmatprep.mubr.bf16.mxu0 0
        %1279 = vmatmul.mubr.bf16.gmra.mrb[0].mxu0 %v1241
        %v1280 = vpop.f32.mrb[0].mxu0
        %v1281 = vadd.f32 0.0, %v1280
        %v1282 = vpop.f32.mrb[0].mxu0
        %v1283 = vpop.f32.mrb[0].mxu0
        %v1284 = vpop.f32.mrb[0].mxu0
        %1285 = vdwg.mxu0
        %1287 = vrot.lane.b32.xlu0 %v1061, 8
        %v1288 = vpop.permute.xlu0 %1287
        %1291 = vrot.lane.b32.xlu0 %v1171, 16
        %v1292 = vpop.permute.xlu0 %1291
        %1295 = vrot.lane.b32.xlu0 %v1281, 24
        %v1296 = vpop.permute.xlu0 %1295
        %v1298 = vsel %vm847, %v948, %v1288
        %vm1299 = vcmask 130048
        %v1300 = vsel %vm1299, %v1298, %v1292
        %vm1301 = vcmask 195584
        %v1302 = vsel %vm1301, %v1300, %v1296
        %v1303 = vpack.c.bf16 %v1302, %v1302
        %v1304 = vld [vmem:[%s5] sm:$0xf]
        %v1305 = vld [vmem:[%s5 + $0x4] sm:$0xf]
        %v1306 = vld [vmem:[%s5 + $0x8] sm:$0xf]
        %v1307 = vld [vmem:[%s5 + $0xc] sm:$0xf]
        %v1308 = vld [vmem:[%s6] sm:$0x1]
        %v1310 = vlaneseq
        %v1311 = vshrl.u32 %v1310, 7
        %v1312 = vsub.s32 0, %v1311
        %v1313 = vrot.slane %v1308, %v1312
        %v1319 = vunpack.c.l.b16 %v1304
        %v1320 = vunpack.c.l.b16 %v1305
        %v1321 = vunpack.c.l.b16 %v1306
        %v1322 = vunpack.c.l.b16 %v1307
        %v1323 = vpack.c.b16 %v1320, %v1319
        %v1324 = vpack.c.b16 %v1322, %v1321
        %vm1327 = vcmask 261120
        %v1329 = vsel %vm1327, %v1303, 0
        %1331 = vmatprep.subr.bf16.mxu0 0
        %1332 = vmatpush1.bf16.msra.mxu0 %v1323
        %1333 = vmatprep.subr.bf16.mxu0 0
        %1334 = vmatpush1.bf16.msra.mxu0 %v1324
        %1335 = vmatprep.subr.bf16.mxu0 0
        %1336 = vmatpush1.bf16.msra.mxu0 0
        %1337 = vmatprep.subr.bf16.mxu0 0
        %1338 = vmatpush1.bf16.msra.mxu0 0
        %1339 = vmatprep.subr.bf16.mxu0 0
        %1340 = vmatpush1.bf16.msra.mxu0 0
        %1341 = vmatprep.subr.bf16.mxu0 0
        %1342 = vmatpush1.bf16.msra.mxu0 0
        %1343 = vmatprep.subr.bf16.mxu0 0
        %1344 = vmatpush1.bf16.msra.mxu0 0
        %1345 = vmatprep.subr.bf16.mxu0 0
        %1346 = vmatpush1.bf16.msra.mxu0 0
        %1347 = vmatprep.subr.bf16.mxu0 0
        %1348 = vmatpush1.bf16.msra.mxu0 0
        %1349 = vmatprep.subr.bf16.mxu0 0
        %1350 = vmatpush1.bf16.msra.mxu0 0
        %1351 = vmatprep.subr.bf16.mxu0 0
        %1352 = vmatpush1.bf16.msra.mxu0 0
        %1353 = vmatprep.subr.bf16.mxu0 0
        %1354 = vmatpush1.bf16.msra.mxu0 0
        %1355 = vmatprep.subr.bf16.mxu0 0
        %1356 = vmatpush1.bf16.msra.mxu0 0
        %1357 = vmatprep.subr.bf16.mxu0 0
        %1358 = vmatpush1.bf16.msra.mxu0 0
        %1359 = vmatprep.subr.bf16.mxu0 0
        %1360 = vmatpush1.bf16.msra.mxu0 0
        %1361 = vmatprep.subr.bf16.mxu0 0
        %1362 = vmatpush1.bf16.msra.mxu0 0
        %1363 = vmatprep.mubr.bf16.mxu0 0
        %1364 = vmatmul.mubr.bf16.gmra.mrb[0].mxu0 %v1329
        %v1365 = vpop.f32.mrb[0].mxu0
        %v1366 = vadd.f32 %v1313, %v1365
        %v1367 = vpop.f32.mrb[0].mxu0
        %v1368 = vpop.f32.mrb[0].mxu0
        %v1369 = vpop.f32.mrb[0].mxu0
        %1370 = vdwg.mxu0
        %v1371 = vadd.f32 %v565, %v1366
        %v1372 = vld [vmem:[%s7] sm:$0x1]
        %v1373 = vld [vmem:[%s8] sm:$0x1]
        %1374 = vadd.xlane.f32.xlu0 %v1371
        %v1375 = vpop.xlane.xlu0 %1374
        %v1376 = vmul.f32 %v1375, 0.03125
        %v1377 = vsub.f32 %v1371, %v1376
        %v1378 = vmul.f32 %v1377, %v572
        %v1379 = vmul.f32 %v1378, %v1378
        %1380 = vadd.xlane.f32.xlu0 %v1379
        %v1381 = vpop.xlane.xlu0 %1380
        %v1382 = vmul.f32 %v1381, 0.03125
        %v1383 = vadd.f32 %v1382, 1e-05
        %v1384 = vrsqrt.pop %v1383
        %v1385 = vmul.f32 %v1378, %v1384
        %v1387 = vlaneseq
        %v1388 = vshrl.u32 %v1387, 7
        %v1389 = vsub.s32 0, %v1388
        %v1390 = vrot.slane %v1372, %v1389
        %v1392 = vmul.f32 %v1385, %v1390
        %v1394 = vlaneseq
        %v1395 = vshrl.u32 %v1394, 7
        %v1396 = vsub.s32 0, %v1395
        %v1397 = vrot.slane %v1373, %v1396
        %v1399 = vadd.f32 %v1392, %v1397
        %v1400 = vpack.c.bf16 %v1399, %v1399
        %v1401 = vld [vmem:[%s9] sm:$0x1]
        %v1402 = vld [vmem:[%s10] sm:$0x1]
        %1403 = vadd.xlane.f32.xlu0 %v567
        %v1404 = vpop.xlane.xlu0 %1403
        %v1405 = vmul.f32 %v1404, 0.03125
        %v1406 = vsub.f32 %v567, %v1405
        %v1407 = vmul.f32 %v1406, %v572
        %v1408 = vmul.f32 %v1407, %v1407
        %1409 = vadd.xlane.f32.xlu0 %v1408
        %v1410 = vpop.xlane.xlu0 %1409
        %v1411 = vmul.f32 %v1410, 0.03125
        %v1412 = vadd.f32 %v1411, 1e-05
        %v1413 = vrsqrt.pop %v1412
        %v1414 = vmul.f32 %v1407, %v1413
        %v1416 = vlaneseq
        %v1417 = vshrl.u32 %v1416, 7
        %v1418 = vsub.s32 0, %v1417
        %v1419 = vrot.slane %v1401, %v1418
        %v1421 = vmul.f32 %v1414, %v1419
        %v1423 = vlaneseq
        %v1424 = vshrl.u32 %v1423, 7
        %v1425 = vsub.s32 0, %v1424
        %v1426 = vrot.slane %v1402, %v1425
        %v1428 = vadd.f32 %v1421, %v1426
        %v1429 = vpack.c.bf16 %v1428, %v1428
        %v1430 = vld [vmem:[#allocation8] sm:$0xf]
        %v1431 = vld [vmem:[#allocation8 + $0x4] sm:$0xf]
        %v1432 = vld [vmem:[#allocation8 + $0x8] sm:$0xf]
        %v1433 = vld [vmem:[#allocation8 + $0xc] sm:$0xf]
        %v1434 = vld [vmem:[#allocation8 + $0x10] sm:$0xf]
        %v1435 = vld [vmem:[#allocation8 + $0x14] sm:$0xf]
        %v1436 = vld [vmem:[#allocation8 + $0x18] sm:$0xf]
        %v1437 = vld [vmem:[#allocation8 + $0x1c] sm:$0xf]
        %v1438 = vld [vmem:[#allocation8 + $0x20] sm:$0xf]
        %v1439 = vld [vmem:[#allocation8 + $0x24] sm:$0xf]
        %v1440 = vld [vmem:[#allocation8 + $0x28] sm:$0xf]
        %v1441 = vld [vmem:[#allocation8 + $0x2c] sm:$0xf]
        %v1442 = vld [vmem:[#allocation8 + $0x30] sm:$0xf]
        %v1443 = vld [vmem:[#allocation8 + $0x34] sm:$0xf]
        %v1444 = vld [vmem:[#allocation8 + $0x38] sm:$0xf]
        %v1445 = vld [vmem:[#allocation8 + $0x3c] sm:$0xf]
        %v1462 = vunpack.c.l.b16 %v1430
        %v1463 = vunpack.c.l.b16 %v1431
        %v1464 = vunpack.c.l.b16 %v1432
        %v1465 = vunpack.c.l.b16 %v1433
        %v1466 = vunpack.c.l.b16 %v1434
        %v1467 = vunpack.c.l.b16 %v1435
        %v1468 = vunpack.c.l.b16 %v1436
        %v1469 = vunpack.c.l.b16 %v1437
        %v1470 = vunpack.c.l.b16 %v1438
        %v1471 = vunpack.c.l.b16 %v1439
        %v1472 = vunpack.c.l.b16 %v1440
        %v1473 = vunpack.c.l.b16 %v1441
        %v1474 = vunpack.c.l.b16 %v1442
        %v1475 = vunpack.c.l.b16 %v1443
        %v1476 = vunpack.c.l.b16 %v1444
        %v1477 = vunpack.c.l.b16 %v1445
        %v1478 = vpack.c.b16 %v1463, %v1462
        %v1479 = vpack.c.b16 %v1465, %v1464
        %v1480 = vpack.c.b16 %v1467, %v1466
        %v1481 = vpack.c.b16 %v1469, %v1468
        %v1482 = vpack.c.b16 %v1471, %v1470
        %v1483 = vpack.c.b16 %v1473, %v1472
        %v1484 = vpack.c.b16 %v1475, %v1474
        %v1485 = vpack.c.b16 %v1477, %v1476
        %1494 = vmatprep.subr.bf16.mxu0 0
        %1495 = vmatpush1.bf16.msra.mxu0 %v1478
        %1496 = vmatprep.subr.bf16.mxu0 0
        %1497 = vmatpush1.bf16.msra.mxu0 %v1479
        %1498 = vmatprep.subr.bf16.mxu0 0
        %1499 = vmatpush1.bf16.msra.mxu0 %v1480
        %1500 = vmatprep.subr.bf16.mxu0 0
        %1501 = vmatpush1.bf16.msra.mxu0 %v1481
        %1502 = vmatprep.subr.bf16.mxu0 0
        %1503 = vmatpush1.bf16.msra.mxu0 %v1482
        %1504 = vmatprep.subr.bf16.mxu0 0
        %1505 = vmatpush1.bf16.msra.mxu0 %v1483
        %1506 = vmatprep.subr.bf16.mxu0 0
        %1507 = vmatpush1.bf16.msra.mxu0 %v1484
        %1508 = vmatprep.subr.bf16.mxu0 0
        %1509 = vmatpush1.bf16.msra.mxu0 %v1485
        %1510 = vmatprep.subr.bf16.mxu0 0
        %1511 = vmatpush1.bf16.msra.mxu0 0
        %1512 = vmatprep.subr.bf16.mxu0 0
        %1513 = vmatpush1.bf16.msra.mxu0 0
        %1514 = vmatprep.subr.bf16.mxu0 0
        %1515 = vmatpush1.bf16.msra.mxu0 0
        %1516 = vmatprep.subr.bf16.mxu0 0
        %1517 = vmatpush1.bf16.msra.mxu0 0
        %1518 = vmatprep.subr.bf16.mxu0 0
        %1519 = vmatpush1.bf16.msra.mxu0 0
        %1520 = vmatprep.subr.bf16.mxu0 0
        %1521 = vmatpush1.bf16.msra.mxu0 0
        %1522 = vmatprep.subr.bf16.mxu0 0
        %1523 = vmatpush1.bf16.msra.mxu0 0
        %1524 = vmatprep.subr.bf16.mxu0 0
        %1525 = vmatpush1.bf16.msra.mxu0 0
        %1526 = vmatprep.mubr.bf16.mxu0 0
        %1527 = vmatmul.mubr.bf16.gmra.mrb[0].mxu0 %v1400
        %v1528 = vpop.f32.mrb[0].mxu0
        %v1529 = vadd.f32 0.0, %v1528
        %v1530 = vpop.f32.mrb[0].mxu0
        %v1531 = vpop.f32.mrb[0].mxu0
        %v1532 = vpop.f32.mrb[0].mxu0
        %1533 = vdwg.mxu0
        %v1534 = vmul.f32 %v1529, 0.35355338
        %v1535 = vpack.c.bf16 %v1534, %v1534
        %1536 = vmatprep.subr.bf16.mxu0 0
        %1537 = vmatpush1.bf16.xpose.msra.mxu0 %v1429
        %1538 = vmatprep.subr.bf16.mxu0 0
        %1539 = vmatpush1.bf16.xpose.msra.mxu0 0
        %1540 = vmatprep.subr.bf16.mxu0 0
        %1541 = vmatpush1.bf16.xpose.msra.mxu0 0
        %1542 = vmatprep.subr.bf16.mxu0 0
        %1543 = vmatpush1.bf16.xpose.msra.mxu0 0
        %1544 = vmatprep.subr.bf16.mxu0 0
        %1545 = vmatpush1.bf16.xpose.msra.mxu0 0
        %1546 = vmatprep.subr.bf16.mxu0 0
        %1547 = vmatpush1.bf16.xpose.msra.mxu0 0
        %1548 = vmatprep.subr.bf16.mxu0 0
        %1549 = vmatpush1.bf16.xpose.msra.mxu0 0
        %1550 = vmatprep.subr.bf16.mxu0 0
        %1551 = vmatpush1.bf16.xpose.msra.mxu0 0
        %1552 = vmatprep.subr.bf16.mxu0 0
        %1553 = vmatpush1.bf16.xpose.msra.mxu0 0
        %1554 = vmatprep.subr.bf16.mxu0 0
        %1555 = vmatpush1.bf16.xpose.msra.mxu0 0
        %1556 = vmatprep.subr.bf16.mxu0 0
        %1557 = vmatpush1.bf16.xpose.msra.mxu0 0
        %1558 = vmatprep.subr.bf16.mxu0 0
        %1559 = vmatpush1.bf16.xpose.msra.mxu0 0
        %1560 = vmatprep.subr.bf16.mxu0 0
        %1561 = vmatpush1.bf16.xpose.msra.mxu0 0
        %1562 = vmatprep.subr.bf16.mxu0 0
        %1563 = vmatpush1.bf16.xpose.msra.mxu0 0
        %1564 = vmatprep.subr.bf16.mxu0 0
        %1565 = vmatpush1.bf16.xpose.msra.mxu0 0
        %1566 = vmatprep.subr.bf16.mxu0 0
        %1567 = vmatpush1.bf16.xpose.msra.mxu0 0
        %1568 = vmatprep.mubr.bf16.mxu0 0
        %1569 = vmatmul.mubr.bf16.gmra.mrb[0].mxu0 %v1535
        %v1570 = vpop.f32.mrb[0].mxu0
        %v1571 = vadd.f32 0.0, %v1570
        %v1572 = vpop.f32.mrb[0].mxu0
        %v1573 = vpop.f32.mrb[0].mxu0
        %v1574 = vpop.f32.mrb[0].mxu0
        %1575 = vdwg.mxu0
        %v1576 = vsel %vm847, %v1571, -inf
        %1577 = vmax.xlane.f32.xlu0 %v1576
        %v1578 = vpop.xlane.xlu0 %1577
        %v1579 = vsub.f32 %v1571, %v1578
        %v1580 = vmul.f32 %v1579, 1.442695
        %v1581 = vpow.pop %v1580
        %v1582 = vsel %vm847, %v1581, 0.0
        %1583 = vadd.xlane.f32.xlu0 %v1582
        %v1584 = vpop.xlane.xlu0 %1583
        %v1585 = vrcp.pop %v1584
        %v1586 = vmul.f32 %v1581, %v1585
        %v1587 = vpack.c.bf16 %v1586, %v1586
        %v1589 = vsel %vm847, %v1587, 0
        %v1592 = vsel %vm909, %v1429, 0
        %1594 = vmatprep.subr.bf16.mxu0 0
        %1595 = vmatpush1.bf16.msra.mxu0 %v1592
        %1596 = vmatprep.subr.bf16.mxu0 0
        %1597 = vmatpush1.bf16.msra.mxu0 0
        %1598 = vmatprep.subr.bf16.mxu0 0
        %1599 = vmatpush1.bf16.msra.mxu0 0
        %1600 = vmatprep.subr.bf16.mxu0 0
        %1601 = vmatpush1.bf16.msra.mxu0 0
        %1602 = vmatprep.subr.bf16.mxu0 0
        %1603 = vmatpush1.bf16.msra.mxu0 0
        %1604 = vmatprep.subr.bf16.mxu0 0
        %1605 = vmatpush1.bf16.msra.mxu0 0
        %1606 = vmatprep.subr.bf16.mxu0 0
        %1607 = vmatpush1.bf16.msra.mxu0 0
        %1608 = vmatprep.subr.bf16.mxu0 0
        %1609 = vmatpush1.bf16.msra.mxu0 0
        %1610 = vmatprep.subr.bf16.mxu0 0
        %1611 = vmatpush1.bf16.msra.mxu0 0
        %1612 = vmatprep.subr.bf16.mxu0 0
        %1613 = vmatpush1.bf16.msra.mxu0 0
        %1614 = vmatprep.subr.bf16.mxu0 0
        %1615 = vmatpush1.bf16.msra.mxu0 0
        %1616 = vmatprep.subr.bf16.mxu0 0
        %1617 = vmatpush1.bf16.msra.mxu0 0
        %1618 = vmatprep.subr.bf16.mxu0 0
        %1619 = vmatpush1.bf16.msra.mxu0 0
        %1620 = vmatprep.subr.bf16.mxu0 0
        %1621 = vmatpush1.bf16.msra.mxu0 0
        %1622 = vmatprep.subr.bf16.mxu0 0
        %1623 = vmatpush1.bf16.msra.mxu0 0
        %1624 = vmatprep.subr.bf16.mxu0 0
        %1625 = vmatpush1.bf16.msra.mxu0 0
        %1626 = vmatprep.mubr.bf16.mxu0 0
        %1627 = vmatmul.mubr.bf16.gmra.mrb[0].mxu0 %v1589
        %v1628 = vpop.f32.mrb[0].mxu0
        %v1629 = vadd.f32 0.0, %v1628
        %v1630 = vpop.f32.mrb[0].mxu0
        %v1631 = vpop.f32.mrb[0].mxu0
        %v1632 = vpop.f32.mrb[0].mxu0
        %1633 = vdwg.mxu0
        %v1634 = vpack.c.bf16 %v1629, %v1629
        %v1635 = vld [vmem:[#allocation10] sm:$0xf]
        %v1636 = vld [vmem:[#allocation10 + $0x4] sm:$0xf]
        %v1637 = vld [vmem:[#allocation10 + $0x8] sm:$0xf]
        %v1638 = vld [vmem:[#allocation10 + $0xc] sm:$0xf]
        %v1639 = vld [vmem:[#allocation10 + $0x10] sm:$0xf]
        %v1640 = vld [vmem:[#allocation10 + $0x14] sm:$0xf]
        %v1641 = vld [vmem:[#allocation10 + $0x18] sm:$0xf]
        %v1642 = vld [vmem:[#allocation10 + $0x1c] sm:$0xf]
        %v1643 = vld [vmem:[#allocation10 + $0x20] sm:$0xf]
        %v1644 = vld [vmem:[#allocation10 + $0x24] sm:$0xf]
        %v1645 = vld [vmem:[#allocation10 + $0x28] sm:$0xf]
        %v1646 = vld [vmem:[#allocation10 + $0x2c] sm:$0xf]
        %v1647 = vld [vmem:[#allocation10 + $0x30] sm:$0xf]
        %v1648 = vld [vmem:[#allocation10 + $0x34] sm:$0xf]
        %v1649 = vld [vmem:[#allocation10 + $0x38] sm:$0xf]
        %v1650 = vld [vmem:[#allocation10 + $0x3c] sm:$0xf]
        %v1651 = vld [vmem:[%s13] sm:$0x1]
        %v1653 = vlaneseq
        %v1654 = vshrl.u32 %v1653, 7
        %v1655 = vsub.s32 0, %v1654
        %v1656 = vrot.slane %v1651, %v1655
        %v1674 = vunpack.c.l.b16 %v1635
        %v1675 = vunpack.c.l.b16 %v1636
        %v1676 = vunpack.c.l.b16 %v1637
        %v1677 = vunpack.c.l.b16 %v1638
        %v1678 = vunpack.c.l.b16 %v1639
        %v1679 = vunpack.c.l.b16 %v1640
        %v1680 = vunpack.c.l.b16 %v1641
        %v1681 = vunpack.c.l.b16 %v1642
        %v1682 = vunpack.c.l.b16 %v1643
        %v1683 = vunpack.c.l.b16 %v1644
        %v1684 = vunpack.c.l.b16 %v1645
        %v1685 = vunpack.c.l.b16 %v1646
        %v1686 = vunpack.c.l.b16 %v1647
        %v1687 = vunpack.c.l.b16 %v1648
        %v1688 = vunpack.c.l.b16 %v1649
        %v1689 = vunpack.c.l.b16 %v1650
        %v1690 = vpack.c.b16 %v1675, %v1674
        %v1691 = vpack.c.b16 %v1677, %v1676
        %v1692 = vpack.c.b16 %v1679, %v1678
        %v1693 = vpack.c.b16 %v1681, %v1680
        %v1694 = vpack.c.b16 %v1683, %v1682
        %v1695 = vpack.c.b16 %v1685, %v1684
        %v1696 = vpack.c.b16 %v1687, %v1686
        %v1697 = vpack.c.b16 %v1689, %v1688
        %1706 = vmatprep.subr.bf16.mxu0 0
        %1707 = vmatpush1.bf16.msra.mxu0 %v1690
        %1708 = vmatprep.subr.bf16.mxu0 0
        %1709 = vmatpush1.bf16.msra.mxu0 %v1691
        %1710 = vmatprep.subr.bf16.mxu0 0
        %1711 = vmatpush1.bf16.msra.mxu0 %v1692
        %1712 = vmatprep.subr.bf16.mxu0 0
        %1713 = vmatpush1.bf16.msra.mxu0 %v1693
        %1714 = vmatprep.subr.bf16.mxu0 0
        %1715 = vmatpush1.bf16.msra.mxu0 %v1694
        %1716 = vmatprep.subr.bf16.mxu0 0
        %1717 = vmatpush1.bf16.msra.mxu0 %v1695
        %1718 = vmatprep.subr.bf16.mxu0 0
        %1719 = vmatpush1.bf16.msra.mxu0 %v1696
        %1720 = vmatprep.subr.bf16.mxu0 0
        %1721 = vmatpush1.bf16.msra.mxu0 %v1697
        %1722 = vmatprep.subr.bf16.mxu0 0
        %1723 = vmatpush1.bf16.msra.mxu0 0
        %1724 = vmatprep.subr.bf16.mxu0 0
        %1725 = vmatpush1.bf16.msra.mxu0 0
        %1726 = vmatprep.subr.bf16.mxu0 0
        %1727 = vmatpush1.bf16.msra.mxu0 0
        %1728 = vmatprep.subr.bf16.mxu0 0
        %1729 = vmatpush1.bf16.msra.mxu0 0
        %1730 = vmatprep.subr.bf16.mxu0 0
        %1731 = vmatpush1.bf16.msra.mxu0 0
        %1732 = vmatprep.subr.bf16.mxu0 0
        %1733 = vmatpush1.bf16.msra.mxu0 0
        %1734 = vmatprep.subr.bf16.mxu0 0
        %1735 = vmatpush1.bf16.msra.mxu0 0
        %1736 = vmatprep.subr.bf16.mxu0 0
        %1737 = vmatpush1.bf16.msra.mxu0 0
        %1738 = vmatprep.mubr.bf16.mxu0 0
        %1739 = vmatmul.mubr.bf16.gmra.mrb[0].mxu0 %v1634
        %v1740 = vpop.f32.mrb[0].mxu0
        %v1741 = vadd.f32 %v1656, %v1740
        %v1742 = vpop.f32.mrb[0].mxu0
        %v1743 = vpop.f32.mrb[0].mxu0
        %v1744 = vpop.f32.mrb[0].mxu0
        %1745 = vdwg.mxu0
        %v1746 = vadd.f32 %v1371, %v1741
        %1747 = vst [vmem:[%s562] sm:$0xff] %v1746
        %s1748 = sand.u32 %s347, 1
        %s1749 = scalar_lea.sflag [#allocation4], %s1748
        %s1750 = sand.u32 %s347, 1
        %s1751 = smul.addr %s1750, 8
        %s1752 = scalar_lea.vmem [#allocation11], %s1751
        // Predicated region
        $region97: #{tpu_custom_call.1} parent=75 // pred_check
          %p1753 = pneg %p357
        $region98: #{tpu_custom_call.1} parent=75 // pred_check_branch
          %1755 = sbr.rel (%p1753) target = $region100
        $region99: #{tpu_custom_call.1} parent=75 // pred_region
          %s1757 = ssub.s32 128, 128
          %1758 = vsyncadd %s1749, %s1757
          %s1759 = smul.addr %s35, 128
          %s1760 = scalar_lea.hbm %s14, %s1759
          %s1762 = sshll.u32 %s1752, 4
          %s1763 = int_to_ptr.vmem [resolvable:$true] %s1762
          %1765 = dma.vmem_to_hbm [thread:$0]  %s1763, 128, %s1760, %s1749
        $region100: #{tpu_custom_call.1} parent=75 // pred_fallthru
          _
      $region76: #{tpu_custom_call.1} parent=5 // pred_fallthru
        _
      %p1766 = scmp.le.s32.totalorder 2, %s30
      // Predicated region
      $region101: #{tpu_custom_call.1} parent=5 // pred_check
        %p1767 = pneg %p1766
      $region102: #{tpu_custom_call.1} parent=5 // pred_check_branch
        %1769 = sbr.rel (%p1767) target = $region104
      $region103: #{tpu_custom_call.1} parent=5 // pred_region
        %s1770 = ssub.s32 %s30, 2
        // Predicated region
        $region105: #{tpu_custom_call.1} parent=103 // pred_check
          %p1771 = pneg %p363
        $region106: #{tpu_custom_call.1} parent=103 // pred_check_branch
          %1773 = sbr.rel (%p1771) target = $region108
        $region107: #{tpu_custom_call.1} parent=103 // pred_region
          %s1774 = sand.u32 %s348, 1
          %s1775 = scalar_lea.sflag [#allocation4], %s1774
          %s1776 = sand.u32 %s348, 1
          %s1777 = smul.addr %s1776, 8
          %s1778 = scalar_lea.vmem [#allocation11], %s1777
          %1779 = dma.done %s1775, 128
        $region108: #{tpu_custom_call.1} parent=103 // pred_fallthru
          _
      $region104: #{tpu_custom_call.1} parent=5 // pred_fallthru
        _
    $region6: #{tpu_custom_call.1} parent=1 // loop_footer
      %s34 = sadd.s32 1, %s30
    $region7: #{tpu_custom_call.1} parent=1 // loop_footer_branch
      %29 = sbr.rel target = $region3
    $region8: #{tpu_custom_call.1} parent=1 // loop_exit
      _
    %1780 = vsyncpa [#allocation3], 1
    %s1781 = scalar_lea.sflag [#allocation3], 1
    %1782 = vsyncpa %s1781, 1
    %1783 = vsyncpa [#allocation6], 1
    %s1784 = scalar_lea.sflag [#allocation6], 1
    %1785 = vsyncpa %s1784, 1
    %1786 = vsyncpa [#allocation9], 1
    %1787 = vsyncpa [#allocation4], 1
    %s1788 = scalar_lea.sflag [#allocation4], 1
    %1789 = vsyncpa %s1788, 1

</llo_original>
